<compile_context>
chip_gen: v7x
topology: tpu7x:2x2x1
jax: 0.10.0
libtpu: 0.0.40
codegen_flags: <defaults>
</compile_context>

<pallas_src>
import numpy as np
import jax
import jax.numpy as jnp
from jax.experimental import pallas as pl
from jax.experimental.pallas import tpu as pltpu


_COMPILER_PARAMS = pltpu.CompilerParams(vmem_limit_bytes=32 * 1024 * 1024)


# --------------------------------------------------------------------------------------
# Kernel 1: RGCNConv (basis decomposition) + GraphConv, dense-adjacency formulation.
# --------------------------------------------------------------------------------------
def rgcn_graphconv_kernel(x_ref, a_rel_ref, a2_ref, w_rel_ref, w_root_ref, b_rgcn_ref,
                          wg_nbr_ref, wg_root_ref, b_gc_ref, out_ref):
    x = x_ref[...]                                                         # (Np, Dx)
    num_rel = a_rel_ref.shape[0]

    # RGCN: out1_i = sum_r sum_j A_r[i, j] * (x_j @ W_r) + x_i @ W_root + b
    out1 = jnp.dot(x, w_root_ref[...], preferred_element_type=jnp.float32) + b_rgcn_ref[...]
    for r in range(num_rel):                                               # static, small R
        xr = jnp.dot(x, w_rel_ref[r], preferred_element_type=jnp.float32)           # (Np, H)
        out1 = out1 + jnp.dot(a_rel_ref[r], xr, preferred_element_type=jnp.float32)

    # GraphConv: out2_i = sum_j A2[i, j] * (out1_j @ Wg_nbr) + out1_i @ Wg_root + b
    h = jnp.dot(out1, wg_nbr_ref[...], preferred_element_type=jnp.float32)
    out2 = (jnp.dot(a2_ref[...], h, preferred_element_type=jnp.float32)
            + jnp.dot(out1, wg_root_ref[...], preferred_element_type=jnp.float32)
            + b_gc_ref[...])
    out_ref[...] = out2


# --------------------------------------------------------------------------------------
# Kernel 2: MatchingAttention('general2') over all timesteps + Linear/ReLU/Linear +
#           log_softmax (nodal_attn=True branch of classify_node_features).
# --------------------------------------------------------------------------------------
def matchatt_classify_kernel(em_ref, mask_ref, w_att_ref, b_att_ref,
                             w_lin_ref, b_lin_ref, w_fc_ref, b_fc_ref, out_ref):
    B, S, D = em_ref.shape
    em = em_ref[...]                                                       # (B, S, D)
    mask = mask_ref[...]                                                   # (B, S)
    m3 = mask[:, None, :]                                                  # (B, 1, S)

    # transform(x) for every query timestep at once.
    q = (jnp.dot(em.reshape(B * S, D), w_att_ref[...],
                 preferred_element_type=jnp.float32) + b_att_ref[...]).reshape(B, S, D)

    # scores[b, t, s] = <q[b, t], em[b, s]>; mask, tanh, softmax over s, re-mask,
    # renormalize — exactly MatchingAttention(att_type='general2') with a 0/1 mask.
    scores = jnp.einsum('btd,bsd->bts', q, em, preferred_element_type=jnp.float32)
    a = jnp.tanh(scores * m3)
    p = jnp.exp(a - jnp.max(a, axis=2, keepdims=True))
    p = p / jnp.sum(p, axis=2, keepdims=True)
    p = p * m3
    alpha = p / jnp.sum(p, axis=2, keepdims=True)

    att = jnp.einsum('bts,bsd->btd', alpha, em, preferred_element_type=jnp.float32)

    # Linear + ReLU + (dropout == identity) + Linear + log_softmax on a flat (B*S, *) slab.
    att2 = att.reshape(B * S, D)
    hidden = jnp.maximum(
        jnp.dot(att2, w_lin_ref[...], preferred_element_type=jnp.float32) + b_lin_ref[...], 0.0)
    logits = jnp.dot(hidden, w_fc_ref[...], preferred_element_type=jnp.float32) + b_fc_ref[...]
    z = logits - jnp.max(logits, axis=1, keepdims=True)
    out_ref[...] = z - jnp.log(jnp.sum(jnp.exp(z), axis=1, keepdims=True))


# --------------------------------------------------------------------------------------
# Kernel 3: nodal_attn=False branch (flat Linear/ReLU/Linear + log_softmax).
# --------------------------------------------------------------------------------------
def classify_flat_kernel(em_ref, w_lin_ref, b_lin_ref, w_fc_ref, b_fc_ref, out_ref):
    hidden = jnp.maximum(
        jnp.dot(em_ref[...], w_lin_ref[...], preferred_element_type=jnp.float32)
        + b_lin_ref[...], 0.0)
    logits = jnp.dot(hidden, w_fc_ref[...], preferred_element_type=jnp.float32) + b_fc_ref[...]
    z = logits - jnp.max(logits, axis=1, keepdims=True)
    out_ref[...] = z - jnp.log(jnp.sum(jnp.exp(z), axis=1, keepdims=True))


# --------------------------------------------------------------------------------------
# Wrapper: GraphNetwork.forward (use_GCN=False, return_feature=False, avec=False).
# --------------------------------------------------------------------------------------
def graph_network_forward(x, edge_index, edge_type, edge_norm, seq_lengths, umask,
                          params, nodal_attn=True, avec=False):
    if avec:
        raise NotImplementedError("TODO(synk): avec=True regression head not implemented")
    x = x.astype(jnp.float32)
    N, Dx = x.shape
    H = params['rgcn_root'].shape[1]
    R = params['rgcn_comp'].shape[0]
    C = params['fc_w'].shape[1]
    Np = int(-(-N // 8) * 8)                       # pad node count to a sublane multiple

    src = edge_index[0]
    dst = edge_index[1]
    en = edge_norm.astype(jnp.float32)

    # Per-relation weights from the basis decomposition + dense (padded) adjacencies.
    w_rel = jnp.einsum('rb,bio->rio', params['rgcn_comp'], params['rgcn_bases'])  # (R,Dx,H)
    a_rel = jnp.zeros((R, Np, Np), jnp.float32).at[edge_type, dst, src].add(en)
    a2 = jnp.zeros((Np, Np), jnp.float32).at[dst, src].add(1.0)
    x_pad = jnp.zeros((Np, Dx), jnp.float32).at[:N].set(x)

    out2 = pl.pallas_call(
        rgcn_graphconv_kernel,
        out_shape=jax.ShapeDtypeStruct((Np, H), jnp.float32),
        compiler_params=_COMPILER_PARAMS,
    )(x_pad, a_rel, a2, w_rel, params['rgcn_root'], params['rgcn_bias'],
      params['gc_w_nbr'], params['gc_w_root'], params['gc_bias'])

    emotions_pad = jnp.concatenate([x_pad, out2], axis=1)       # (Np, Dx + H)

    if not nodal_attn:
        lp = pl.pallas_call(
            classify_flat_kernel,
            out_shape=jax.ShapeDtypeStruct((Np, C), jnp.float32),
            compiler_params=_COMPILER_PARAMS,
        )(emotions_pad, params['lin_w'], params['lin_b'], params['fc_w'], params['fc_b'])
        return lp[:N]

    # attentive_node_features: pad flat nodes into (B, S, D) dialogues (layout plumbing).
    B = len(seq_lengths)
    S = int(max(seq_lengths))
    starts = np.concatenate([[0], np.cumsum(seq_lengths)[:-1]]).astype(np.int64)
    idx = np.zeros((B, S), np.int32)
    for j in range(B):
        for t in range(S):
            idx[j, t] = int(starts[j]) + t if t < int(seq_lengths[j]) else 0
    umask_f = umask.astype(jnp.float32)                          # (B, S)
    em_b = emotions_pad[jnp.asarray(idx)] * umask_f[..., None]   # (B, S, D), pads zeroed

    lp_flat = pl.pallas_call(
        matchatt_classify_kernel,
        out_shape=jax.ShapeDtypeStruct((B * S, C), jnp.float32),
        compiler_params=_COMPILER_PARAMS,
    )(em_b, umask_f, params['att_w'], params['att_b'],
      params['lin_w'], params['lin_b'], params['fc_w'], params['fc_b'])

    # torch.cat([log_prob[:, j, :][:seq_lengths[j]] for j in range(B)]) — ragged gather.
    gather = np.concatenate([j * S + np.arange(int(seq_lengths[j]))
                             for j in range(B)]).astype(np.int32)
    return lp_flat[jnp.asarray(gather)]


# --------------------------------------------------------------------------------------
# Pure-JAX reference mirroring the PyTorch forward (scatter-based graph convs,
# per-timestep MatchingAttention loop, eval-mode dropout).
# --------------------------------------------------------------------------------------
def _matchatt_general2_ref(M, x_in, mask, w_t, b_t):
    xq = x_in @ w_t + b_t                                        # (B, D)
    Mm = jnp.transpose(M, (1, 2, 0)) * mask[:, None, :]          # (B, D, S)
    al = jnp.einsum('bd,bds->bs', xq, Mm) * mask
    al = jax.nn.softmax(jnp.tanh(al), axis=1)
    alm = al * mask
    alpha = alm / jnp.sum(alm, axis=1, keepdims=True)
    return jnp.einsum('bs,sbd->bd', alpha, M)


def graph_network_reference(x, edge_index, edge_type, edge_norm, seq_lengths, umask,
                            params, nodal_attn=True):
    x = x.astype(jnp.float32)
    N = x.shape[0]
    src, dst = edge_index[0], edge_index[1]

    # RGCNConv (basis decomposition, per-edge message + scatter-add, root + bias).
    w_rel = jnp.einsum('rb,bio->rio', params['rgcn_comp'], params['rgcn_bases'])
    msg = jnp.einsum('ed,edo->eo', x[src], w_rel[edge_type]) * edge_norm[:, None]
    out1 = jnp.zeros((N, w_rel.shape[2]), jnp.float32).at[dst].add(msg)
    out1 = out1 + x @ params['rgcn_root'] + params['rgcn_bias']

    # GraphConv (add-aggregation of transformed neighbours + root linear + bias).
    h = out1 @ params['gc_w_nbr']
    agg = jnp.zeros_like(h).at[dst].add(h[src])
    out2 = agg + out1 @ params['gc_w_root'] + params['gc_bias']

    emotions = jnp.concatenate([x, out2], axis=1)                # (N, De)

    if not nodal_attn:
        hidden = jax.nn.relu(emotions @ params['lin_w'] + params['lin_b'])
        logits = hidden @ params['fc_w'] + params['fc_b']
        return jax.nn.log_softmax(logits, axis=1)

    B = len(seq_lengths)
    S = int(max(seq_lengths))
    De = emotions.shape[1]
    starts = np.concatenate([[0], np.cumsum(seq_lengths)[:-1]]).astype(np.int64)
    cols = []
    for j in range(B):
        ej = emotions[int(starts[j]):int(starts[j]) + int(seq_lengths[j])]
        if int(seq_lengths[j]) < S:
            ej = jnp.concatenate(
                [ej, jnp.zeros((S - int(seq_lengths[j]), De), jnp.float32)], 0)
        cols.append(ej)
    M = jnp.stack(cols, axis=1)                                  # (S, B, De)
    umask_f = umask.astype(jnp.float32)

    att = jnp.stack([_matchatt_general2_ref(M, M[t], umask_f, params['att_w'], params['att_b'])
                     for t in range(S)], axis=0)                 # (S, B, De)
    hidden = jax.nn.relu(jnp.einsum('sbd,dh->sbh', att, params['lin_w']) + params['lin_b'])
    logits = jnp.einsum('sbh,hc->sbc', hidden, params['fc_w']) + params['fc_b']
    lp = jax.nn.log_softmax(logits, axis=2)
    return jnp.concatenate([lp[:int(seq_lengths[j]), j, :] for j in range(B)], axis=0)


if __name__ == "__main__":
    key = jax.random.PRNGKey(0)
    ks = jax.random.split(key, 16)

    # Small but representative GraphNetwork config.
    Dx, H, C = 32, 32, 6                  # num_features, hidden_size, num_classes
    n_speakers = 2
    R = 2 * n_speakers * n_speakers       # num_relations = 8 (DialogueGCN convention)
    num_bases = 30                        # module default
    seq_lengths = [8, 5]
    B, S = len(seq_lengths), max(seq_lengths)
    N = sum(seq_lengths)
    De = Dx + H

    def init(k, shape):
        return 0.1 * jax.random.normal(k, shape, jnp.float32)

    # Weights stored pre-transposed to (in_dim, out_dim); biases as (1, out_dim).
    params = {
        'rgcn_comp': init(ks[0], (R, num_bases)),
        'rgcn_bases': init(ks[1], (num_bases, Dx, H)),
        'rgcn_root': init(ks[2], (Dx, H)),
        'rgcn_bias': init(ks[3], (1, H)),
        'gc_w_nbr': init(ks[4], (H, H)),
        'gc_w_root': init(ks[5], (H, H)),
        'gc_bias': init(ks[6], (1, H)),
        'att_w': init(ks[7], (De, De)),   # MatchingAttention 'general2' transform (bias=True)
        'att_b': init(ks[8], (1, De)),
        'lin_w': init(ks[9], (De, H)),
        'lin_b': init(ks[10], (1, H)),
        'fc_w': init(ks[11], (H, C)),
        'fc_b': init(ks[12], (1, C)),
    }

    x = jax.random.normal(ks[13], (N, Dx), jnp.float32)

    # Window-based edges within each dialogue (past/future window of 3), DialogueGCN-style.
    starts = np.concatenate([[0], np.cumsum(seq_lengths)[:-1]]).astype(np.int64)
    src_l, dst_l = [], []
    for j in range(B):
        for ti in range(seq_lengths[j]):
            for tj in range(seq_lengths[j]):
                if abs(ti - tj) <= 3:
                    src_l.append(int(starts[j]) + tj)
                    dst_l.append(int(starts[j]) + ti)
    E = len(src_l)
    edge_index = jnp.asarray(np.stack([src_l, dst_l], 0), jnp.int32)     # (2, E)
    edge_type = jax.random.randint(ks[14], (E,), 0, R, jnp.int32)
    edge_norm = jax.random.uniform(ks[15], (E,), jnp.float32, 0.1, 1.0)
    umask = jnp.asarray(
        np.stack([(np.arange(S) < L).astype(np.float32) for L in seq_lengths], 0))  # (B, S)

    out_attn = graph_network_forward(x, edge_index, edge_type, edge_norm,
                                     seq_lengths, umask, params, nodal_attn=True)
    out_flat = graph_network_forward(x, edge_index, edge_type, edge_norm,
                                     seq_lengths, umask, params, nodal_attn=False)
    jax.block_until_ready((out_attn, out_flat))

    ref_attn = graph_network_reference(x, edge_index, edge_type, edge_norm,
                                       seq_lengths, umask, params, nodal_attn=True)
    ref_flat = graph_network_reference(x, edge_index, edge_type, edge_norm,
                                       seq_lengths, umask, params, nodal_attn=False)

    assert out_attn.shape == (N, C) and out_flat.shape == (N, C)
    assert jnp.allclose(out_attn, ref_attn, atol=1e-3, rtol=1e-3), \
        float(jnp.max(jnp.abs(out_attn - ref_attn)))
    assert jnp.allclose(out_flat, ref_flat, atol=1e-3, rtol=1e-3), \
        float(jnp.max(jnp.abs(out_flat - ref_flat)))
    print("KERNEL_OK")
</pallas_src>

<mosaic_0001>
module attributes {stable_mosaic.version = 11 : i64} {
  func.func @rgcn_graphconv_kernel(%arg0: memref<16x32xf32, #tpu.memory_space<vmem>>, %arg1: memref<8x16x16xf32, #tpu.memory_space<vmem>>, %arg2: memref<16x16xf32, #tpu.memory_space<vmem>>, %arg3: memref<8x32x32xf32, #tpu.memory_space<vmem>>, %arg4: memref<32x32xf32, #tpu.memory_space<vmem>>, %arg5: memref<1x32xf32, #tpu.memory_space<vmem>>, %arg6: memref<32x32xf32, #tpu.memory_space<vmem>>, %arg7: memref<32x32xf32, #tpu.memory_space<vmem>>, %arg8: memref<1x32xf32, #tpu.memory_space<vmem>>, %arg9: memref<16x32xf32, #tpu.memory_space<vmem>>) attributes {dimension_semantics = [], scalar_prefetch = 0 : i64, scratch_operands = 0 : i64, tpu.core_type = #tpu.core_type<tc>} {
    %c0 = arith.constant 0 : index
    %c0_0 = arith.constant 0 : index
    %0 = vector.load %arg0[%c0, %c0_0] : memref<16x32xf32, #tpu.memory_space<vmem>>, vector<16x32xf32>
    %c0_1 = arith.constant 0 : index
    %c0_2 = arith.constant 0 : index
    %1 = vector.load %arg4[%c0_1, %c0_2] : memref<32x32xf32, #tpu.memory_space<vmem>>, vector<32x32xf32>
    %cst = arith.constant dense<0.000000e+00> : vector<16x32xf32>
    %2 = tpu.matmul %0, %1, %cst {dimension_numbers = #tpu.dot_dimension_numbers<[1], [0], [0], [1], [0, 0, 1, 1], [], []>} : vector<16x32xf32>, vector<32x32xf32>, vector<16x32xf32> -> vector<16x32xf32>
    %c0_3 = arith.constant 0 : index
    %c0_4 = arith.constant 0 : index
    %3 = vector.load %arg5[%c0_3, %c0_4] : memref<1x32xf32, #tpu.memory_space<vmem>>, vector<1x32xf32>
    %4 = vector.broadcast %3 : vector<1x32xf32> to vector<16x32xf32>
    %5 = arith.addf %2, %4 : vector<16x32xf32>
    %c0_5 = arith.constant 0 : index
    %c0_6 = arith.constant 0 : index
    %c0_7 = arith.constant 0 : index
    %6 = vector.load %arg3[%c0_5, %c0_6, %c0_7] : memref<8x32x32xf32, #tpu.memory_space<vmem>>, vector<1x32x32xf32>
    %7 = vector.shape_cast %6 : vector<1x32x32xf32> to vector<32x32xf32>
    %cst_8 = arith.constant dense<0.000000e+00> : vector<16x32xf32>
    %8 = tpu.matmul %0, %7, %cst_8 {dimension_numbers = #tpu.dot_dimension_numbers<[1], [0], [0], [1], [0, 0, 1, 1], [], []>} : vector<16x32xf32>, vector<32x32xf32>, vector<16x32xf32> -> vector<16x32xf32>
    %c0_9 = arith.constant 0 : index
    %c0_10 = arith.constant 0 : index
    %c0_11 = arith.constant 0 : index
    %9 = vector.load %arg1[%c0_9, %c0_10, %c0_11] : memref<8x16x16xf32, #tpu.memory_space<vmem>>, vector<1x16x16xf32>
    %10 = vector.shape_cast %9 : vector<1x16x16xf32> to vector<16x16xf32>
    %cst_12 = arith.constant dense<0.000000e+00> : vector<16x32xf32>
    %11 = tpu.matmul %10, %8, %cst_12 {dimension_numbers = #tpu.dot_dimension_numbers<[1], [0], [0], [1], [0, 0, 1, 1], [], []>} : vector<16x16xf32>, vector<16x32xf32>, vector<16x32xf32> -> vector<16x32xf32>
    %12 = arith.addf %5, %11 : vector<16x32xf32>
    %c1 = arith.constant 1 : index
    %c0_13 = arith.constant 0 : index
    %c0_14 = arith.constant 0 : index
    %13 = vector.load %arg3[%c1, %c0_13, %c0_14] : memref<8x32x32xf32, #tpu.memory_space<vmem>>, vector<1x32x32xf32>
    %14 = vector.shape_cast %13 : vector<1x32x32xf32> to vector<32x32xf32>
    %cst_15 = arith.constant dense<0.000000e+00> : vector<16x32xf32>
    %15 = tpu.matmul %0, %14, %cst_15 {dimension_numbers = #tpu.dot_dimension_numbers<[1], [0], [0], [1], [0, 0, 1, 1], [], []>} : vector<16x32xf32>, vector<32x32xf32>, vector<16x32xf32> -> vector<16x32xf32>
    %c1_16 = arith.constant 1 : index
    %c0_17 = arith.constant 0 : index
    %c0_18 = arith.constant 0 : index
    %16 = vector.load %arg1[%c1_16, %c0_17, %c0_18] : memref<8x16x16xf32, #tpu.memory_space<vmem>>, vector<1x16x16xf32>
    %17 = vector.shape_cast %16 : vector<1x16x16xf32> to vector<16x16xf32>
    %cst_19 = arith.constant dense<0.000000e+00> : vector<16x32xf32>
    %18 = tpu.matmul %17, %15, %cst_19 {dimension_numbers = #tpu.dot_dimension_numbers<[1], [0], [0], [1], [0, 0, 1, 1], [], []>} : vector<16x16xf32>, vector<16x32xf32>, vector<16x32xf32> -> vector<16x32xf32>
    %19 = arith.addf %12, %18 : vector<16x32xf32>
    %c2 = arith.constant 2 : index
    %c0_20 = arith.constant 0 : index
    %c0_21 = arith.constant 0 : index
    %20 = vector.load %arg3[%c2, %c0_20, %c0_21] : memref<8x32x32xf32, #tpu.memory_space<vmem>>, vector<1x32x32xf32>
    %21 = vector.shape_cast %20 : vector<1x32x32xf32> to vector<32x32xf32>
    %cst_22 = arith.constant dense<0.000000e+00> : vector<16x32xf32>
    %22 = tpu.matmul %0, %21, %cst_22 {dimension_numbers = #tpu.dot_dimension_numbers<[1], [0], [0], [1], [0, 0, 1, 1], [], []>} : vector<16x32xf32>, vector<32x32xf32>, vector<16x32xf32> -> vector<16x32xf32>
    %c2_23 = arith.constant 2 : index
    %c0_24 = arith.constant 0 : index
    %c0_25 = arith.constant 0 : index
    %23 = vector.load %arg1[%c2_23, %c0_24, %c0_25] : memref<8x16x16xf32, #tpu.memory_space<vmem>>, vector<1x16x16xf32>
    %24 = vector.shape_cast %23 : vector<1x16x16xf32> to vector<16x16xf32>
    %cst_26 = arith.constant dense<0.000000e+00> : vector<16x32xf32>
    %25 = tpu.matmul %24, %22, %cst_26 {dimension_numbers = #tpu.dot_dimension_numbers<[1], [0], [0], [1], [0, 0, 1, 1], [], []>} : vector<16x16xf32>, vector<16x32xf32>, vector<16x32xf32> -> vector<16x32xf32>
    %26 = arith.addf %19, %25 : vector<16x32xf32>
    %c3 = arith.constant 3 : index
    %c0_27 = arith.constant 0 : index
    %c0_28 = arith.constant 0 : index
    %27 = vector.load %arg3[%c3, %c0_27, %c0_28] : memref<8x32x32xf32, #tpu.memory_space<vmem>>, vector<1x32x32xf32>
    %28 = vector.shape_cast %27 : vector<1x32x32xf32> to vector<32x32xf32>
    %cst_29 = arith.constant dense<0.000000e+00> : vector<16x32xf32>
    %29 = tpu.matmul %0, %28, %cst_29 {dimension_numbers = #tpu.dot_dimension_numbers<[1], [0], [0], [1], [0, 0, 1, 1], [], []>} : vector<16x32xf32>, vector<32x32xf32>, vector<16x32xf32> -> vector<16x32xf32>
    %c3_30 = arith.constant 3 : index
    %c0_31 = arith.constant 0 : index
    %c0_32 = arith.constant 0 : index
    %30 = vector.load %arg1[%c3_30, %c0_31, %c0_32] : memref<8x16x16xf32, #tpu.memory_space<vmem>>, vector<1x16x16xf32>
    %31 = vector.shape_cast %30 : vector<1x16x16xf32> to vector<16x16xf32>
    %cst_33 = arith.constant dense<0.000000e+00> : vector<16x32xf32>
    %32 = tpu.matmul %31, %29, %cst_33 {dimension_numbers = #tpu.dot_dimension_numbers<[1], [0], [0], [1], [0, 0, 1, 1], [], []>} : vector<16x16xf32>, vector<16x32xf32>, vector<16x32xf32> -> vector<16x32xf32>
    %33 = arith.addf %26, %32 : vector<16x32xf32>
    %c4 = arith.constant 4 : index
    %c0_34 = arith.constant 0 : index
    %c0_35 = arith.constant 0 : index
    %34 = vector.load %arg3[%c4, %c0_34, %c0_35] : memref<8x32x32xf32, #tpu.memory_space<vmem>>, vector<1x32x32xf32>
    %35 = vector.shape_cast %34 : vector<1x32x32xf32> to vector<32x32xf32>
    %cst_36 = arith.constant dense<0.000000e+00> : vector<16x32xf32>
    %36 = tpu.matmul %0, %35, %cst_36 {dimension_numbers = #tpu.dot_dimension_numbers<[1], [0], [0], [1], [0, 0, 1, 1], [], []>} : vector<16x32xf32>, vector<32x32xf32>, vector<16x32xf32> -> vector<16x32xf32>
    %c4_37 = arith.constant 4 : index
    %c0_38 = arith.constant 0 : index
    %c0_39 = arith.constant 0 : index
    %37 = vector.load %arg1[%c4_37, %c0_38, %c0_39] : memref<8x16x16xf32, #tpu.memory_space<vmem>>, vector<1x16x16xf32>
    %38 = vector.shape_cast %37 : vector<1x16x16xf32> to vector<16x16xf32>
    %cst_40 = arith.constant dense<0.000000e+00> : vector<16x32xf32>
    %39 = tpu.matmul %38, %36, %cst_40 {dimension_numbers = #tpu.dot_dimension_numbers<[1], [0], [0], [1], [0, 0, 1, 1], [], []>} : vector<16x16xf32>, vector<16x32xf32>, vector<16x32xf32> -> vector<16x32xf32>
    %40 = arith.addf %33, %39 : vector<16x32xf32>
    %c5 = arith.constant 5 : index
    %c0_41 = arith.constant 0 : index
    %c0_42 = arith.constant 0 : index
    %41 = vector.load %arg3[%c5, %c0_41, %c0_42] : memref<8x32x32xf32, #tpu.memory_space<vmem>>, vector<1x32x32xf32>
    %42 = vector.shape_cast %41 : vector<1x32x32xf32> to vector<32x32xf32>
    %cst_43 = arith.constant dense<0.000000e+00> : vector<16x32xf32>
    %43 = tpu.matmul %0, %42, %cst_43 {dimension_numbers = #tpu.dot_dimension_numbers<[1], [0], [0], [1], [0, 0, 1, 1], [], []>} : vector<16x32xf32>, vector<32x32xf32>, vector<16x32xf32> -> vector<16x32xf32>
    %c5_44 = arith.constant 5 : index
    %c0_45 = arith.constant 0 : index
    %c0_46 = arith.constant 0 : index
    %44 = vector.load %arg1[%c5_44, %c0_45, %c0_46] : memref<8x16x16xf32, #tpu.memory_space<vmem>>, vector<1x16x16xf32>
    %45 = vector.shape_cast %44 : vector<1x16x16xf32> to vector<16x16xf32>
    %cst_47 = arith.constant dense<0.000000e+00> : vector<16x32xf32>
    %46 = tpu.matmul %45, %43, %cst_47 {dimension_numbers = #tpu.dot_dimension_numbers<[1], [0], [0], [1], [0, 0, 1, 1], [], []>} : vector<16x16xf32>, vector<16x32xf32>, vector<16x32xf32> -> vector<16x32xf32>
    %47 = arith.addf %40, %46 : vector<16x32xf32>
    %c6 = arith.constant 6 : index
    %c0_48 = arith.constant 0 : index
    %c0_49 = arith.constant 0 : index
    %48 = vector.load %arg3[%c6, %c0_48, %c0_49] : memref<8x32x32xf32, #tpu.memory_space<vmem>>, vector<1x32x32xf32>
    %49 = vector.shape_cast %48 : vector<1x32x32xf32> to vector<32x32xf32>
    %cst_50 = arith.constant dense<0.000000e+00> : vector<16x32xf32>
    %50 = tpu.matmul %0, %49, %cst_50 {dimension_numbers = #tpu.dot_dimension_numbers<[1], [0], [0], [1], [0, 0, 1, 1], [], []>} : vector<16x32xf32>, vector<32x32xf32>, vector<16x32xf32> -> vector<16x32xf32>
    %c6_51 = arith.constant 6 : index
    %c0_52 = arith.constant 0 : index
    %c0_53 = arith.constant 0 : index
    %51 = vector.load %arg1[%c6_51, %c0_52, %c0_53] : memref<8x16x16xf32, #tpu.memory_space<vmem>>, vector<1x16x16xf32>
    %52 = vector.shape_cast %51 : vector<1x16x16xf32> to vector<16x16xf32>
    %cst_54 = arith.constant dense<0.000000e+00> : vector<16x32xf32>
    %53 = tpu.matmul %52, %50, %cst_54 {dimension_numbers = #tpu.dot_dimension_numbers<[1], [0], [0], [1], [0, 0, 1, 1], [], []>} : vector<16x16xf32>, vector<16x32xf32>, vector<16x32xf32> -> vector<16x32xf32>
    %54 = arith.addf %47, %53 : vector<16x32xf32>
    %c7 = arith.constant 7 : index
    %c0_55 = arith.constant 0 : index
    %c0_56 = arith.constant 0 : index
    %55 = vector.load %arg3[%c7, %c0_55, %c0_56] : memref<8x32x32xf32, #tpu.memory_space<vmem>>, vector<1x32x32xf32>
    %56 = vector.shape_cast %55 : vector<1x32x32xf32> to vector<32x32xf32>
    %cst_57 = arith.constant dense<0.000000e+00> : vector<16x32xf32>
    %57 = tpu.matmul %0, %56, %cst_57 {dimension_numbers = #tpu.dot_dimension_numbers<[1], [0], [0], [1], [0, 0, 1, 1], [], []>} : vector<16x32xf32>, vector<32x32xf32>, vector<16x32xf32> -> vector<16x32xf32>
    %c7_58 = arith.constant 7 : index
    %c0_59 = arith.constant 0 : index
    %c0_60 = arith.constant 0 : index
    %58 = vector.load %arg1[%c7_58, %c0_59, %c0_60] : memref<8x16x16xf32, #tpu.memory_space<vmem>>, vector<1x16x16xf32>
    %59 = vector.shape_cast %58 : vector<1x16x16xf32> to vector<16x16xf32>
    %cst_61 = arith.constant dense<0.000000e+00> : vector<16x32xf32>
    %60 = tpu.matmul %59, %57, %cst_61 {dimension_numbers = #tpu.dot_dimension_numbers<[1], [0], [0], [1], [0, 0, 1, 1], [], []>} : vector<16x16xf32>, vector<16x32xf32>, vector<16x32xf32> -> vector<16x32xf32>
    %61 = arith.addf %54, %60 : vector<16x32xf32>
    %c0_62 = arith.constant 0 : index
    %c0_63 = arith.constant 0 : index
    %62 = vector.load %arg6[%c0_62, %c0_63] : memref<32x32xf32, #tpu.memory_space<vmem>>, vector<32x32xf32>
    %cst_64 = arith.constant dense<0.000000e+00> : vector<16x32xf32>
    %63 = tpu.matmul %61, %62, %cst_64 {dimension_numbers = #tpu.dot_dimension_numbers<[1], [0], [0], [1], [0, 0, 1, 1], [], []>} : vector<16x32xf32>, vector<32x32xf32>, vector<16x32xf32> -> vector<16x32xf32>
    %c0_65 = arith.constant 0 : index
    %c0_66 = arith.constant 0 : index
    %64 = vector.load %arg2[%c0_65, %c0_66] : memref<16x16xf32, #tpu.memory_space<vmem>>, vector<16x16xf32>
    %cst_67 = arith.constant dense<0.000000e+00> : vector<16x32xf32>
    %65 = tpu.matmul %64, %63, %cst_67 {dimension_numbers = #tpu.dot_dimension_numbers<[1], [0], [0], [1], [0, 0, 1, 1], [], []>} : vector<16x16xf32>, vector<16x32xf32>, vector<16x32xf32> -> vector<16x32xf32>
    %c0_68 = arith.constant 0 : index
    %c0_69 = arith.constant 0 : index
    %66 = vector.load %arg7[%c0_68, %c0_69] : memref<32x32xf32, #tpu.memory_space<vmem>>, vector<32x32xf32>
    %cst_70 = arith.constant dense<0.000000e+00> : vector<16x32xf32>
    %67 = tpu.matmul %61, %66, %cst_70 {dimension_numbers = #tpu.dot_dimension_numbers<[1], [0], [0], [1], [0, 0, 1, 1], [], []>} : vector<16x32xf32>, vector<32x32xf32>, vector<16x32xf32> -> vector<16x32xf32>
    %68 = arith.addf %65, %67 : vector<16x32xf32>
    %c0_71 = arith.constant 0 : index
    %c0_72 = arith.constant 0 : index
    %69 = vector.load %arg8[%c0_71, %c0_72] : memref<1x32xf32, #tpu.memory_space<vmem>>, vector<1x32xf32>
    %70 = vector.broadcast %69 : vector<1x32xf32> to vector<16x32xf32>
    %71 = arith.addf %68, %70 : vector<16x32xf32>
    %c0_73 = arith.constant 0 : index
    %c0_74 = arith.constant 0 : index
    %72 = vector.load %arg9[%c0_73, %c0_74] : memref<16x32xf32, #tpu.memory_space<vmem>>, vector<16x32xf32>
    tpu.vector_store %arg9[%c0_73, %c0_74], %71 {strides = array<i32>} : memref<16x32xf32, #tpu.memory_space<vmem>>, vector<16x32xf32>,
    return
  }
}

</mosaic_0001>

<llo_original>
// kernel: tpu_custom_call.1
$region0: #{tpu_custom_call.1}
  #allocation0 [shape = 'u32[]', space=smem, size = 0x4, offset = 0x4, fixed_abs, tag = 'smem constant byte address 0x4 - core index']
  #allocation1 [shape = 'u32[144,128]{1,0:T(1,128)}', space=vmem, size = 0x12000, scoped, tag = 'internal scratch']
  %s0 = inlined_call_operand.hbm [shape: f32[16,32], index: 0, kind: input, shape index: {}]
  %s1 = inlined_call_operand.hbm [shape: f32[8,16,16], index: 1, kind: input, shape index: {}]
  %s2 = inlined_call_operand.hbm [shape: f32[16,16], index: 2, kind: input, shape index: {}]
  %s3 = inlined_call_operand.hbm [shape: f32[8,32,32], index: 3, kind: input, shape index: {}]
  %s4 = inlined_call_operand.hbm [shape: f32[32,32], index: 4, kind: input, shape index: {}]
  %s5 = inlined_call_operand.vmem [shape: f32[1,32], index: 5, kind: input, shape index: {}]
  %s6 = inlined_call_operand.hbm [shape: f32[32,32], index: 6, kind: input, shape index: {}]
  %s7 = inlined_call_operand.hbm [shape: f32[32,32], index: 7, kind: input, shape index: {}]
  %s8 = inlined_call_operand.vmem [shape: f32[1,32], index: 8, kind: input, shape index: {}]
  %s9 = inlined_call_operand.hbm [shape: f32[16,32], index: 9, kind: output, shape index: {}]
  %s10 = sld [smem:[#allocation0]]
  $region74: #{tpu_custom_call.1} parent=0
    _
  %s12 = ssub.s32 1, %s10
  %s13 = scalar_select 0, %s12, %s10
  $region1: #{tpu_custom_call.1} parent=0
    #allocation2 [shape = 'u8[8192]{0}', space=vmem, size = 0x2000, scoped, tag = 'input window, operand 0, single buffered']
    #allocation3 [shape = 's32[1]{0}', space=sflag, size = 0x4, scoped, tag = 'scoped memory for tpu_custom_call.1']
    #allocation4 [shape = 's32[1]{0}', space=sflag, size = 0x4, scoped, tag = 'scoped memory for tpu_custom_call.1']
    #allocation5 [shape = 'u8[65536]{0}', space=vmem, size = 0x10000, scoped, tag = 'input window, operand 1, single buffered']
    #allocation6 [shape = 's32[1]{0}', space=sflag, size = 0x4, scoped, tag = 'scoped memory for tpu_custom_call.1']
    #allocation7 [shape = 'u8[8192]{0}', space=vmem, size = 0x2000, scoped, tag = 'input window, operand 2, single buffered']
    #allocation8 [shape = 'u8[131072]{0}', space=vmem, size = 0x20000, scoped, tag = 'input window, operand 3, single buffered']
    #allocation9 [shape = 's32[1]{0}', space=sflag, size = 0x4, scoped, tag = 'scoped memory for tpu_custom_call.1']
    #allocation10 [shape = 'u8[16384]{0}', space=vmem, size = 0x4000, scoped, tag = 'input window, operand 4, single buffered']
    #allocation11 [shape = 'u8[16384]{0}', space=vmem, size = 0x4000, scoped, tag = 'input window, operand 6, single buffered']
    #allocation12 [shape = 's32[1]{0}', space=sflag, size = 0x4, scoped, tag = 'scoped memory for tpu_custom_call.1']
    #allocation13 [shape = 'u8[16384]{0}', space=vmem, size = 0x4000, scoped, tag = 'input window, operand 7, single buffered']
    #allocation14 [shape = 'u8[8192]{0}', space=vmem, size = 0x2000, scoped, tag = 'output window, operand 0, single buffered']
    %14 = vsyncpa [#allocation3], 0
    %15 = vsyncpa [#allocation6], 0
    %16 = vsyncpa [#allocation9], 0
    %17 = vsyncpa [#allocation12], 0
    %18 = vsyncpa [#allocation4], 0
    // Predicated region
    $region2: #{tpu_custom_call.1} parent=1 // pred_check
      _
    $region3: #{tpu_custom_call.1} parent=1 // pred_check_branch
      %20 = sbr.rel (0) target = $region5
    $region4: #{tpu_custom_call.1} parent=1 // pred_region
      %s22 = ssub.s32 256, 256
      %23 = vsyncadd [#allocation3], %s22
      %s24 = sshll.u32 [#allocation2], 4
      %s25 = int_to_ptr.vmem [resolvable:$true] %s24
      %30 = dma.hbm_to_vmem [thread:$0]  %s0, 256, %s25, [#allocation3], 128, 128, 8
    $region5: #{tpu_custom_call.1} parent=1 // pred_fallthru
      _
    // Predicated region
    $region6: #{tpu_custom_call.1} parent=1 // pred_check
      _
    $region7: #{tpu_custom_call.1} parent=1 // pred_check_branch
      %32 = sbr.rel (0) target = $region9
    $region8: #{tpu_custom_call.1} parent=1 // pred_region
      %s34 = ssub.s32 2048, 2048
      %35 = vsyncadd [#allocation6], %s34
      %s36 = sshll.u32 [#allocation5], 4
      %s37 = int_to_ptr.vmem [resolvable:$true] %s36
      %42 = dma.hbm_to_vmem [thread:$0]  %s1, 2048, %s37, [#allocation6], 128, 128, 8
    $region9: #{tpu_custom_call.1} parent=1 // pred_fallthru
      _
    // Predicated region
    $region10: #{tpu_custom_call.1} parent=1 // pred_check
      _
    $region11: #{tpu_custom_call.1} parent=1 // pred_check_branch
      %44 = sbr.rel (0) target = $region13
    $region12: #{tpu_custom_call.1} parent=1 // pred_region
      %s46 = ssub.s32 256, 256
      %47 = vsyncadd [#allocation6], %s46
      %s48 = sshll.u32 [#allocation7], 4
      %s49 = int_to_ptr.vmem [resolvable:$true] %s48
      %54 = dma.hbm_to_vmem [thread:$0]  %s2, 256, %s49, [#allocation6], 128, 128, 8
    $region13: #{tpu_custom_call.1} parent=1 // pred_fallthru
      _
    // Predicated region
    $region14: #{tpu_custom_call.1} parent=1 // pred_check
      _
    $region15: #{tpu_custom_call.1} parent=1 // pred_check_branch
      %56 = sbr.rel (0) target = $region17
    $region16: #{tpu_custom_call.1} parent=1 // pred_region
      %s58 = ssub.s32 4096, 4096
      %59 = vsyncadd [#allocation9], %s58
      %s60 = sshll.u32 [#allocation8], 4
      %s61 = int_to_ptr.vmem [resolvable:$true] %s60
      %66 = dma.hbm_to_vmem [thread:$0]  %s3, 4096, %s61, [#allocation9], 128, 128, 8
    $region17: #{tpu_custom_call.1} parent=1 // pred_fallthru
      _
    // Predicated region
    $region18: #{tpu_custom_call.1} parent=1 // pred_check
      _
    $region19: #{tpu_custom_call.1} parent=1 // pred_check_branch
      %68 = sbr.rel (0) target = $region21
    $region20: #{tpu_custom_call.1} parent=1 // pred_region
      %s70 = ssub.s32 512, 512
      %71 = vsyncadd [#allocation9], %s70
      %s72 = sshll.u32 [#allocation10], 4
      %s73 = int_to_ptr.vmem [resolvable:$true] %s72
      %78 = dma.hbm_to_vmem [thread:$0]  %s4, 512, %s73, [#allocation9], 128, 128, 8
    $region21: #{tpu_custom_call.1} parent=1 // pred_fallthru
      _
    // Predicated region
    $region22: #{tpu_custom_call.1} parent=1 // pred_check
      _
    $region23: #{tpu_custom_call.1} parent=1 // pred_check_branch
      %80 = sbr.rel (0) target = $region25
    $region24: #{tpu_custom_call.1} parent=1 // pred_region
      _
    $region25: #{tpu_custom_call.1} parent=1 // pred_fallthru
      _
    // Predicated region
    $region26: #{tpu_custom_call.1} parent=1 // pred_check
      _
    $region27: #{tpu_custom_call.1} parent=1 // pred_check_branch
      %82 = sbr.rel (0) target = $region29
    $region28: #{tpu_custom_call.1} parent=1 // pred_region
      %s84 = ssub.s32 512, 512
      %85 = vsyncadd [#allocation12], %s84
      %s86 = sshll.u32 [#allocation11], 4
      %s87 = int_to_ptr.vmem [resolvable:$true] %s86
      %92 = dma.hbm_to_vmem [thread:$0]  %s6, 512, %s87, [#allocation12], 128, 128, 8
    $region29: #{tpu_custom_call.1} parent=1 // pred_fallthru
      _
    // Predicated region
    $region30: #{tpu_custom_call.1} parent=1 // pred_check
      _
    $region31: #{tpu_custom_call.1} parent=1 // pred_check_branch
      %94 = sbr.rel (0) target = $region33
    $region32: #{tpu_custom_call.1} parent=1 // pred_region
      %s96 = ssub.s32 512, 512
      %97 = vsyncadd [#allocation12], %s96
      %s98 = sshll.u32 [#allocation13], 4
      %s99 = int_to_ptr.vmem [resolvable:$true] %s98
      %104 = dma.hbm_to_vmem [thread:$0]  %s7, 512, %s99, [#allocation12], 128, 128, 8
    $region33: #{tpu_custom_call.1} parent=1 // pred_fallthru
      _
    // Predicated region
    $region34: #{tpu_custom_call.1} parent=1 // pred_check
      _
    $region35: #{tpu_custom_call.1} parent=1 // pred_check_branch
      %106 = sbr.rel (0) target = $region37
    $region36: #{tpu_custom_call.1} parent=1 // pred_region
      _
    $region37: #{tpu_custom_call.1} parent=1 // pred_fallthru
      _
    // Predicated region
    $region38: #{tpu_custom_call.1} parent=1 // pred_check
      _
    $region39: #{tpu_custom_call.1} parent=1 // pred_check_branch
      %108 = sbr.rel (0) target = $region41
    $region40: #{tpu_custom_call.1} parent=1 // pred_region
      %109 = dma.done [#allocation3], 256
    $region41: #{tpu_custom_call.1} parent=1 // pred_fallthru
      _
    // Predicated region
    $region42: #{tpu_custom_call.1} parent=1 // pred_check
      _
    $region43: #{tpu_custom_call.1} parent=1 // pred_check_branch
      %111 = sbr.rel (0) target = $region45
    $region44: #{tpu_custom_call.1} parent=1 // pred_region
      %112 = dma.done [#allocation6], 2048
    $region45: #{tpu_custom_call.1} parent=1 // pred_fallthru
      _
    // Predicated region
    $region46: #{tpu_custom_call.1} parent=1 // pred_check
      _
    $region47: #{tpu_custom_call.1} parent=1 // pred_check_branch
      %114 = sbr.rel (0) target = $region49
    $region48: #{tpu_custom_call.1} parent=1 // pred_region
      %115 = dma.done [#allocation6], 256
    $region49: #{tpu_custom_call.1} parent=1 // pred_fallthru
      _
    // Predicated region
    $region50: #{tpu_custom_call.1} parent=1 // pred_check
      _
    $region51: #{tpu_custom_call.1} parent=1 // pred_check_branch
      %117 = sbr.rel (0) target = $region53
    $region52: #{tpu_custom_call.1} parent=1 // pred_region
      %118 = dma.done [#allocation9], 4096
    $region53: #{tpu_custom_call.1} parent=1 // pred_fallthru
      _
    // Predicated region
    $region54: #{tpu_custom_call.1} parent=1 // pred_check
      _
    $region55: #{tpu_custom_call.1} parent=1 // pred_check_branch
      %120 = sbr.rel (0) target = $region57
    $region56: #{tpu_custom_call.1} parent=1 // pred_region
      %121 = dma.done [#allocation9], 512
    $region57: #{tpu_custom_call.1} parent=1 // pred_fallthru
      _
    // Predicated region
    $region58: #{tpu_custom_call.1} parent=1 // pred_check
      _
    $region59: #{tpu_custom_call.1} parent=1 // pred_check_branch
      %123 = sbr.rel (0) target = $region61
    $region60: #{tpu_custom_call.1} parent=1 // pred_region
      %124 = dma.done [#allocation12], 512
    $region61: #{tpu_custom_call.1} parent=1 // pred_fallthru
      _
    // Predicated region
    $region62: #{tpu_custom_call.1} parent=1 // pred_check
      _
    $region63: #{tpu_custom_call.1} parent=1 // pred_check_branch
      %126 = sbr.rel (0) target = $region65
    $region64: #{tpu_custom_call.1} parent=1 // pred_region
      %127 = dma.done [#allocation12], 512
    $region65: #{tpu_custom_call.1} parent=1 // pred_fallthru
      _
    %v128 = vld [vmem:[#allocation2] sm:$0xff]
    %v129 = vld [vmem:[#allocation2 + $0x8] sm:$0xff]
    %v130 = vld [vmem:[#allocation10] sm:$0xff]
    %v131 = vld [vmem:[#allocation10 + $0x8] sm:$0xff]
    %v132 = vld [vmem:[#allocation10 + $0x10] sm:$0xff]
    %v133 = vld [vmem:[#allocation10 + $0x18] sm:$0xff]
    %v134 = vld [vmem:[%s5] sm:$0x1]
    %v136 = vlaneseq
    %v137 = vshrl.u32 %v136, 7
    %v138 = vsub.s32 0, %v137
    %v139 = vrot.slane %v134, %v138
    %vm141 = vcmask 261120
    %v143 = vsel %vm141, %v128, 0
    %v146 = vsel %vm141, %v129, 0
    %148 = vmatprep.subr.mxu0 0.0
    %149 = vmatpush1.msra.mxu0 %v130
    %150 = vmatprep.subr.mxu0 0.0
    %151 = vmatpush1.msra.mxu0 %v131
    %152 = vmatprep.subr.mxu0 0.0
    %153 = vmatpush1.msra.mxu0 %v132
    %154 = vmatprep.subr.mxu0 0.0
    %155 = vmatpush1.msra.mxu0 %v133
    %156 = vmatprep.subr.mxu0 0.0
    %157 = vmatpush1.msra.mxu0 0.0
    %158 = vmatprep.subr.mxu0 0.0
    %159 = vmatpush1.msra.mxu0 0.0
    %160 = vmatprep.subr.mxu0 0.0
    %161 = vmatpush1.msra.mxu0 0.0
    %162 = vmatprep.subr.mxu0 0.0
    %163 = vmatpush1.msra.mxu0 0.0
    %164 = vmatprep.subr.mxu0 0.0
    %165 = vmatpush1.msra.mxu0 0.0
    %166 = vmatprep.subr.mxu0 0.0
    %167 = vmatpush1.msra.mxu0 0.0
    %168 = vmatprep.subr.mxu0 0.0
    %169 = vmatpush1.msra.mxu0 0.0
    %170 = vmatprep.subr.mxu0 0.0
    %171 = vmatpush1.msra.mxu0 0.0
    %172 = vmatprep.subr.mxu0 0.0
    %173 = vmatpush1.msra.mxu0 0.0
    %174 = vmatprep.subr.mxu0 0.0
    %175 = vmatpush1.msra.mxu0 0.0
    %176 = vmatprep.subr.mxu0 0.0
    %177 = vmatpush1.msra.mxu0 0.0
    %178 = vmatprep.subr.mxu0 0.0
    %179 = vmatpush1.msra.mxu0 0.0
    %180 = vmatprep.subr.mxu0 0.0
    %181 = vmatpush1.msra.mxu0 0.0
    %182 = vmatprep.subr.mxu0 0.0
    %183 = vmatpush1.msra.mxu0 0.0
    %184 = vmatprep.subr.mxu0 0.0
    %185 = vmatpush1.msra.mxu0 0.0
    %186 = vmatprep.subr.mxu0 0.0
    %187 = vmatpush1.msra.mxu0 0.0
    %188 = vmatprep.subr.mxu0 0.0
    %189 = vmatpush1.msra.mxu0 0.0
    %190 = vmatprep.subr.mxu0 0.0
    %191 = vmatpush1.msra.mxu0 0.0
    %192 = vmatprep.subr.mxu0 0.0
    %193 = vmatpush1.msra.mxu0 0.0
    %194 = vmatprep.subr.mxu0 0.0
    %195 = vmatpush1.msra.mxu0 0.0
    %196 = vmatprep.subr.mxu0 0.0
    %197 = vmatpush1.msra.mxu0 0.0
    %198 = vmatprep.subr.mxu0 0.0
    %199 = vmatpush1.msra.mxu0 0.0
    %200 = vmatprep.subr.mxu0 0.0
    %201 = vmatpush1.msra.mxu0 0.0
    %202 = vmatprep.subr.mxu0 0.0
    %203 = vmatpush1.msra.mxu0 0.0
    %204 = vmatprep.subr.mxu0 0.0
    %205 = vmatpush1.msra.mxu0 0.0
    %206 = vmatprep.subr.mxu0 0.0
    %207 = vmatpush1.msra.mxu0 0.0
    %208 = vmatprep.subr.mxu0 0.0
    %209 = vmatpush1.msra.mxu0 0.0
    %210 = vmatprep.subr.mxu0 0.0
    %211 = vmatpush1.msra.mxu0 0.0
    %212 = vmatprep.mubr.f32.mxu0 0.0
    %213 = vmatmul.mubr.f32.gmra.mrb[0].mxu0 %v143
    %v214 = vpop.f32.mrb[0].mxu0
    %v215 = vadd.f32 %v139, %v214
    %v216 = vpop.f32.mrb[0].mxu0
    %217 = vmatprep.mubr.f32.mxu0 0.0
    %218 = vmatmul.mubr.f32.gmra.mrb[0].mxu0 %v146
    %v219 = vpop.f32.mrb[0].mxu0
    %v220 = vadd.f32 %v139, %v219
    %v221 = vpop.f32.mrb[0].mxu0
    %222 = vdwg.mxu0
    %v223 = vld [vmem:[#allocation8] sm:$0xff]
    %v224 = vld [vmem:[#allocation8 + $0x8] sm:$0xff]
    %v225 = vld [vmem:[#allocation8 + $0x10] sm:$0xff]
    %v226 = vld [vmem:[#allocation8 + $0x18] sm:$0xff]
    %227 = vmatprep.subr.mxu0 0.0
    %228 = vmatpush1.msra.mxu0 %v223
    %229 = vmatprep.subr.mxu0 0.0
    %230 = vmatpush1.msra.mxu0 %v224
    %231 = vmatprep.subr.mxu0 0.0
    %232 = vmatpush1.msra.mxu0 %v225
    %233 = vmatprep.subr.mxu0 0.0
    %234 = vmatpush1.msra.mxu0 %v226
    %235 = vmatprep.subr.mxu0 0.0
    %236 = vmatpush1.msra.mxu0 0.0
    %237 = vmatprep.subr.mxu0 0.0
    %238 = vmatpush1.msra.mxu0 0.0
    %239 = vmatprep.subr.mxu0 0.0
    %240 = vmatpush1.msra.mxu0 0.0
    %241 = vmatprep.subr.mxu0 0.0
    %242 = vmatpush1.msra.mxu0 0.0
    %243 = vmatprep.subr.mxu0 0.0
    %244 = vmatpush1.msra.mxu0 0.0
    %245 = vmatprep.subr.mxu0 0.0
    %246 = vmatpush1.msra.mxu0 0.0
    %247 = vmatprep.subr.mxu0 0.0
    %248 = vmatpush1.msra.mxu0 0.0
    %249 = vmatprep.subr.mxu0 0.0
    %250 = vmatpush1.msra.mxu0 0.0
    %251 = vmatprep.subr.mxu0 0.0
    %252 = vmatpush1.msra.mxu0 0.0
    %253 = vmatprep.subr.mxu0 0.0
    %254 = vmatpush1.msra.mxu0 0.0
    %255 = vmatprep.subr.mxu0 0.0
    %256 = vmatpush1.msra.mxu0 0.0
    %257 = vmatprep.subr.mxu0 0.0
    %258 = vmatpush1.msra.mxu0 0.0
    %259 = vmatprep.subr.mxu0 0.0
    %260 = vmatpush1.msra.mxu0 0.0
    %261 = vmatprep.subr.mxu0 0.0
    %262 = vmatpush1.msra.mxu0 0.0
    %263 = vmatprep.subr.mxu0 0.0
    %264 = vmatpush1.msra.mxu0 0.0
    %265 = vmatprep.subr.mxu0 0.0
    %266 = vmatpush1.msra.mxu0 0.0
    %267 = vmatprep.subr.mxu0 0.0
    %268 = vmatpush1.msra.mxu0 0.0
    %269 = vmatprep.subr.mxu0 0.0
    %270 = vmatpush1.msra.mxu0 0.0
    %271 = vmatprep.subr.mxu0 0.0
    %272 = vmatpush1.msra.mxu0 0.0
    %273 = vmatprep.subr.mxu0 0.0
    %274 = vmatpush1.msra.mxu0 0.0
    %275 = vmatprep.subr.mxu0 0.0
    %276 = vmatpush1.msra.mxu0 0.0
    %277 = vmatprep.subr.mxu0 0.0
    %278 = vmatpush1.msra.mxu0 0.0
    %279 = vmatprep.subr.mxu0 0.0
    %280 = vmatpush1.msra.mxu0 0.0
    %281 = vmatprep.subr.mxu0 0.0
    %282 = vmatpush1.msra.mxu0 0.0
    %283 = vmatprep.subr.mxu0 0.0
    %284 = vmatpush1.msra.mxu0 0.0
    %285 = vmatprep.subr.mxu0 0.0
    %286 = vmatpush1.msra.mxu0 0.0
    %287 = vmatprep.subr.mxu0 0.0
    %288 = vmatpush1.msra.mxu0 0.0
    %289 = vmatprep.subr.mxu0 0.0
    %290 = vmatpush1.msra.mxu0 0.0
    %291 = vmatprep.mubr.f32.mxu0 0.0
    %292 = vmatmul.mubr.f32.gmra.mrb[0].mxu0 %v143
    %v293 = vpop.f32.mrb[0].mxu0
    %v294 = vadd.f32 0.0, %v293
    %v295 = vpop.f32.mrb[0].mxu0
    %296 = vmatprep.mubr.f32.mxu0 0.0
    %297 = vmatmul.mubr.f32.gmra.mrb[0].mxu0 %v146
    %v298 = vpop.f32.mrb[0].mxu0
    %v299 = vadd.f32 0.0, %v298
    %v300 = vpop.f32.mrb[0].mxu0
    %301 = vdwg.mxu0
    %v302 = vld [vmem:[#allocation5] sm:$0xff]
    %v303 = vld [vmem:[#allocation5 + $0x8] sm:$0xff]
    %vm304 = vcmask 130048
    %v306 = vsel %vm304, %v302, 0
    %v309 = vsel %vm304, %v303, 0
    %311 = vmatprep.subr.mxu0 0.0
    %312 = vmatpush1.msra.mxu0 %v294
    %313 = vmatprep.subr.mxu0 0.0
    %314 = vmatpush1.msra.mxu0 %v299
    %315 = vmatprep.subr.mxu0 0.0
    %316 = vmatpush1.msra.mxu0 0.0
    %317 = vmatprep.subr.mxu0 0.0
    %318 = vmatpush1.msra.mxu0 0.0
    %319 = vmatprep.subr.mxu0 0.0
    %320 = vmatpush1.msra.mxu0 0.0
    %321 = vmatprep.subr.mxu0 0.0
    %322 = vmatpush1.msra.mxu0 0.0
    %323 = vmatprep.subr.mxu0 0.0
    %324 = vmatpush1.msra.mxu0 0.0
    %325 = vmatprep.subr.mxu0 0.0
    %326 = vmatpush1.msra.mxu0 0.0
    %327 = vmatprep.subr.mxu0 0.0
    %328 = vmatpush1.msra.mxu0 0.0
    %329 = vmatprep.subr.mxu0 0.0
    %330 = vmatpush1.msra.mxu0 0.0
    %331 = vmatprep.subr.mxu0 0.0
    %332 = vmatpush1.msra.mxu0 0.0
    %333 = vmatprep.subr.mxu0 0.0
    %334 = vmatpush1.msra.mxu0 0.0
    %335 = vmatprep.subr.mxu0 0.0
    %336 = vmatpush1.msra.mxu0 0.0
    %337 = vmatprep.subr.mxu0 0.0
    %338 = vmatpush1.msra.mxu0 0.0
    %339 = vmatprep.subr.mxu0 0.0
    %340 = vmatpush1.msra.mxu0 0.0
    %341 = vmatprep.subr.mxu0 0.0
    %342 = vmatpush1.msra.mxu0 0.0
    %343 = vmatprep.subr.mxu0 0.0
    %344 = vmatpush1.msra.mxu0 0.0
    %345 = vmatprep.subr.mxu0 0.0
    %346 = vmatpush1.msra.mxu0 0.0
    %347 = vmatprep.subr.mxu0 0.0
    %348 = vmatpush1.msra.mxu0 0.0
    %349 = vmatprep.subr.mxu0 0.0
    %350 = vmatpush1.msra.mxu0 0.0
    %351 = vmatprep.subr.mxu0 0.0
    %352 = vmatpush1.msra.mxu0 0.0
    %353 = vmatprep.subr.mxu0 0.0
    %354 = vmatpush1.msra.mxu0 0.0
    %355 = vmatprep.subr.mxu0 0.0
    %356 = vmatpush1.msra.mxu0 0.0
    %357 = vmatprep.subr.mxu0 0.0
    %358 = vmatpush1.msra.mxu0 0.0
    %359 = vmatprep.subr.mxu0 0.0
    %360 = vmatpush1.msra.mxu0 0.0
    %361 = vmatprep.subr.mxu0 0.0
    %362 = vmatpush1.msra.mxu0 0.0
    %363 = vmatprep.subr.mxu0 0.0
    %364 = vmatpush1.msra.mxu0 0.0
    %365 = vmatprep.subr.mxu0 0.0
    %366 = vmatpush1.msra.mxu0 0.0
    %367 = vmatprep.subr.mxu0 0.0
    %368 = vmatpush1.msra.mxu0 0.0
    %369 = vmatprep.subr.mxu0 0.0
    %370 = vmatpush1.msra.mxu0 0.0
    %371 = vmatprep.subr.mxu0 0.0
    %372 = vmatpush1.msra.mxu0 0.0
    %373 = vmatprep.subr.mxu0 0.0
    %374 = vmatpush1.msra.mxu0 0.0
    %375 = vmatprep.mubr.f32.mxu0 0.0
    %376 = vmatmul.mubr.f32.gmra.mrb[0].mxu0 %v306
    %v377 = vpop.f32.mrb[0].mxu0
    %v378 = vadd.f32 0.0, %v377
    %v379 = vpop.f32.mrb[0].mxu0
    %380 = vmatprep.mubr.f32.mxu0 0.0
    %381 = vmatmul.mubr.f32.gmra.mrb[0].mxu0 %v309
    %v382 = vpop.f32.mrb[0].mxu0
    %v383 = vadd.f32 0.0, %v382
    %v384 = vpop.f32.mrb[0].mxu0
    %385 = vdwg.mxu0
    %v386 = vadd.f32 %v215, %v378
    %v387 = vadd.f32 %v220, %v383
    %s388 = scalar_lea.vmem [#allocation8], 32
    %v389 = vld [vmem:[%s388] sm:$0xff]
    %v390 = vld [vmem:[%s388 + $0x8] sm:$0xff]
    %v391 = vld [vmem:[%s388 + $0x10] sm:$0xff]
    %v392 = vld [vmem:[%s388 + $0x18] sm:$0xff]
    %393 = vmatprep.subr.mxu0 0.0
    %394 = vmatpush1.msra.mxu0 %v389
    %395 = vmatprep.subr.mxu0 0.0
    %396 = vmatpush1.msra.mxu0 %v390
    %397 = vmatprep.subr.mxu0 0.0
    %398 = vmatpush1.msra.mxu0 %v391
    %399 = vmatprep.subr.mxu0 0.0
    %400 = vmatpush1.msra.mxu0 %v392
    %401 = vmatprep.subr.mxu0 0.0
    %402 = vmatpush1.msra.mxu0 0.0
    %403 = vmatprep.subr.mxu0 0.0
    %404 = vmatpush1.msra.mxu0 0.0
    %405 = vmatprep.subr.mxu0 0.0
    %406 = vmatpush1.msra.mxu0 0.0
    %407 = vmatprep.subr.mxu0 0.0
    %408 = vmatpush1.msra.mxu0 0.0
    %409 = vmatprep.subr.mxu0 0.0
    %410 = vmatpush1.msra.mxu0 0.0
    %411 = vmatprep.subr.mxu0 0.0
    %412 = vmatpush1.msra.mxu0 0.0
    %413 = vmatprep.subr.mxu0 0.0
    %414 = vmatpush1.msra.mxu0 0.0
    %415 = vmatprep.subr.mxu0 0.0
    %416 = vmatpush1.msra.mxu0 0.0
    %417 = vmatprep.subr.mxu0 0.0
    %418 = vmatpush1.msra.mxu0 0.0
    %419 = vmatprep.subr.mxu0 0.0
    %420 = vmatpush1.msra.mxu0 0.0
    %421 = vmatprep.subr.mxu0 0.0
    %422 = vmatpush1.msra.mxu0 0.0
    %423 = vmatprep.subr.mxu0 0.0
    %424 = vmatpush1.msra.mxu0 0.0
    %425 = vmatprep.subr.mxu0 0.0
    %426 = vmatpush1.msra.mxu0 0.0
    %427 = vmatprep.subr.mxu0 0.0
    %428 = vmatpush1.msra.mxu0 0.0
    %429 = vmatprep.subr.mxu0 0.0
    %430 = vmatpush1.msra.mxu0 0.0
    %431 = vmatprep.subr.mxu0 0.0
    %432 = vmatpush1.msra.mxu0 0.0
    %433 = vmatprep.subr.mxu0 0.0
    %434 = vmatpush1.msra.mxu0 0.0
    %435 = vmatprep.subr.mxu0 0.0
    %436 = vmatpush1.msra.mxu0 0.0
    %437 = vmatprep.subr.mxu0 0.0
    %438 = vmatpush1.msra.mxu0 0.0
    %439 = vmatprep.subr.mxu0 0.0
    %440 = vmatpush1.msra.mxu0 0.0
    %441 = vmatprep.subr.mxu0 0.0
    %442 = vmatpush1.msra.mxu0 0.0
    %443 = vmatprep.subr.mxu0 0.0
    %444 = vmatpush1.msra.mxu0 0.0
    %445 = vmatprep.subr.mxu0 0.0
    %446 = vmatpush1.msra.mxu0 0.0
    %447 = vmatprep.subr.mxu0 0.0
    %448 = vmatpush1.msra.mxu0 0.0
    %449 = vmatprep.subr.mxu0 0.0
    %450 = vmatpush1.msra.mxu0 0.0
    %451 = vmatprep.subr.mxu0 0.0
    %452 = vmatpush1.msra.mxu0 0.0
    %453 = vmatprep.subr.mxu0 0.0
    %454 = vmatpush1.msra.mxu0 0.0
    %455 = vmatprep.subr.mxu0 0.0
    %456 = vmatpush1.msra.mxu0 0.0
    %457 = vmatprep.mubr.f32.mxu0 0.0
    %458 = vmatmul.mubr.f32.gmra.mrb[0].mxu0 %v143
    %v459 = vpop.f32.mrb[0].mxu0
    %v460 = vadd.f32 0.0, %v459
    %v461 = vpop.f32.mrb[0].mxu0
    %462 = vmatprep.mubr.f32.mxu0 0.0
    %463 = vmatmul.mubr.f32.gmra.mrb[0].mxu0 %v146
    %v464 = vpop.f32.mrb[0].mxu0
    %v465 = vadd.f32 0.0, %v464
    %v466 = vpop.f32.mrb[0].mxu0
    %467 = vdwg.mxu0
    %s468 = scalar_lea.vmem [#allocation5], 16
    %v469 = vld [vmem:[%s468] sm:$0xff]
    %v470 = vld [vmem:[%s468 + $0x8] sm:$0xff]
    %v472 = vsel %vm304, %v469, 0
    %v475 = vsel %vm304, %v470, 0
    %477 = vmatprep.subr.mxu0 0.0
    %478 = vmatpush1.msra.mxu0 %v460
    %479 = vmatprep.subr.mxu0 0.0
    %480 = vmatpush1.msra.mxu0 %v465
    %481 = vmatprep.subr.mxu0 0.0
    %482 = vmatpush1.msra.mxu0 0.0
    %483 = vmatprep.subr.mxu0 0.0
    %484 = vmatpush1.msra.mxu0 0.0
    %485 = vmatprep.subr.mxu0 0.0
    %486 = vmatpush1.msra.mxu0 0.0
    %487 = vmatprep.subr.mxu0 0.0
    %488 = vmatpush1.msra.mxu0 0.0
    %489 = vmatprep.subr.mxu0 0.0
    %490 = vmatpush1.msra.mxu0 0.0
    %491 = vmatprep.subr.mxu0 0.0
    %492 = vmatpush1.msra.mxu0 0.0
    %493 = vmatprep.subr.mxu0 0.0
    %494 = vmatpush1.msra.mxu0 0.0
    %495 = vmatprep.subr.mxu0 0.0
    %496 = vmatpush1.msra.mxu0 0.0
    %497 = vmatprep.subr.mxu0 0.0
    %498 = vmatpush1.msra.mxu0 0.0
    %499 = vmatprep.subr.mxu0 0.0
    %500 = vmatpush1.msra.mxu0 0.0
    %501 = vmatprep.subr.mxu0 0.0
    %502 = vmatpush1.msra.mxu0 0.0
    %503 = vmatprep.subr.mxu0 0.0
    %504 = vmatpush1.msra.mxu0 0.0
    %505 = vmatprep.subr.mxu0 0.0
    %506 = vmatpush1.msra.mxu0 0.0
    %507 = vmatprep.subr.mxu0 0.0
    %508 = vmatpush1.msra.mxu0 0.0
    %509 = vmatprep.subr.mxu0 0.0
    %510 = vmatpush1.msra.mxu0 0.0
    %511 = vmatprep.subr.mxu0 0.0
    %512 = vmatpush1.msra.mxu0 0.0
    %513 = vmatprep.subr.mxu0 0.0
    %514 = vmatpush1.msra.mxu0 0.0
    %515 = vmatprep.subr.mxu0 0.0
    %516 = vmatpush1.msra.mxu0 0.0
    %517 = vmatprep.subr.mxu0 0.0
    %518 = vmatpush1.msra.mxu0 0.0
    %519 = vmatprep.subr.mxu0 0.0
    %520 = vmatpush1.msra.mxu0 0.0
    %521 = vmatprep.subr.mxu0 0.0
    %522 = vmatpush1.msra.mxu0 0.0
    %523 = vmatprep.subr.mxu0 0.0
    %524 = vmatpush1.msra.mxu0 0.0
    %525 = vmatprep.subr.mxu0 0.0
    %526 = vmatpush1.msra.mxu0 0.0
    %527 = vmatprep.subr.mxu0 0.0
    %528 = vmatpush1.msra.mxu0 0.0
    %529 = vmatprep.subr.mxu0 0.0
    %530 = vmatpush1.msra.mxu0 0.0
    %531 = vmatprep.subr.mxu0 0.0
    %532 = vmatpush1.msra.mxu0 0.0
    %533 = vmatprep.subr.mxu0 0.0
    %534 = vmatpush1.msra.mxu0 0.0
    %535 = vmatprep.subr.mxu0 0.0
    %536 = vmatpush1.msra.mxu0 0.0
    %537 = vmatprep.subr.mxu0 0.0
    %538 = vmatpush1.msra.mxu0 0.0
    %539 = vmatprep.subr.mxu0 0.0
    %540 = vmatpush1.msra.mxu0 0.0
    %541 = vmatprep.mubr.f32.mxu0 0.0
    %542 = vmatmul.mubr.f32.gmra.mrb[0].mxu0 %v472
    %v543 = vpop.f32.mrb[0].mxu0
    %v544 = vadd.f32 0.0, %v543
    %v545 = vpop.f32.mrb[0].mxu0
    %546 = vmatprep.mubr.f32.mxu0 0.0
    %547 = vmatmul.mubr.f32.gmra.mrb[0].mxu0 %v475
    %v548 = vpop.f32.mrb[0].mxu0
    %v549 = vadd.f32 0.0, %v548
    %v550 = vpop.f32.mrb[0].mxu0
    %551 = vdwg.mxu0
    %v552 = vadd.f32 %v386, %v544
    %v553 = vadd.f32 %v387, %v549
    %s554 = scalar_lea.vmem [#allocation8], 64
    %v555 = vld [vmem:[%s554] sm:$0xff]
    %v556 = vld [vmem:[%s554 + $0x8] sm:$0xff]
    %v557 = vld [vmem:[%s554 + $0x10] sm:$0xff]
    %v558 = vld [vmem:[%s554 + $0x18] sm:$0xff]
    %559 = vmatprep.subr.mxu0 0.0
    %560 = vmatpush1.msra.mxu0 %v555
    %561 = vmatprep.subr.mxu0 0.0
    %562 = vmatpush1.msra.mxu0 %v556
    %563 = vmatprep.subr.mxu0 0.0
    %564 = vmatpush1.msra.mxu0 %v557
    %565 = vmatprep.subr.mxu0 0.0
    %566 = vmatpush1.msra.mxu0 %v558
    %567 = vmatprep.subr.mxu0 0.0
    %568 = vmatpush1.msra.mxu0 0.0
    %569 = vmatprep.subr.mxu0 0.0
    %570 = vmatpush1.msra.mxu0 0.0
    %571 = vmatprep.subr.mxu0 0.0
    %572 = vmatpush1.msra.mxu0 0.0
    %573 = vmatprep.subr.mxu0 0.0
    %574 = vmatpush1.msra.mxu0 0.0
    %575 = vmatprep.subr.mxu0 0.0
    %576 = vmatpush1.msra.mxu0 0.0
    %577 = vmatprep.subr.mxu0 0.0
    %578 = vmatpush1.msra.mxu0 0.0
    %579 = vmatprep.subr.mxu0 0.0
    %580 = vmatpush1.msra.mxu0 0.0
    %581 = vmatprep.subr.mxu0 0.0
    %582 = vmatpush1.msra.mxu0 0.0
    %583 = vmatprep.subr.mxu0 0.0
    %584 = vmatpush1.msra.mxu0 0.0
    %585 = vmatprep.subr.mxu0 0.0
    %586 = vmatpush1.msra.mxu0 0.0
    %587 = vmatprep.subr.mxu0 0.0
    %588 = vmatpush1.msra.mxu0 0.0
    %589 = vmatprep.subr.mxu0 0.0
    %590 = vmatpush1.msra.mxu0 0.0
    %591 = vmatprep.subr.mxu0 0.0
    %592 = vmatpush1.msra.mxu0 0.0
    %593 = vmatprep.subr.mxu0 0.0
    %594 = vmatpush1.msra.mxu0 0.0
    %595 = vmatprep.subr.mxu0 0.0
    %596 = vmatpush1.msra.mxu0 0.0
    %597 = vmatprep.subr.mxu0 0.0
    %598 = vmatpush1.msra.mxu0 0.0
    %599 = vmatprep.subr.mxu0 0.0
    %600 = vmatpush1.msra.mxu0 0.0
    %601 = vmatprep.subr.mxu0 0.0
    %602 = vmatpush1.msra.mxu0 0.0
    %603 = vmatprep.subr.mxu0 0.0
    %604 = vmatpush1.msra.mxu0 0.0
    %605 = vmatprep.subr.mxu0 0.0
    %606 = vmatpush1.msra.mxu0 0.0
    %607 = vmatprep.subr.mxu0 0.0
    %608 = vmatpush1.msra.mxu0 0.0
    %609 = vmatprep.subr.mxu0 0.0
    %610 = vmatpush1.msra.mxu0 0.0
    %611 = vmatprep.subr.mxu0 0.0
    %612 = vmatpush1.msra.mxu0 0.0
    %613 = vmatprep.subr.mxu0 0.0
    %614 = vmatpush1.msra.mxu0 0.0
    %615 = vmatprep.subr.mxu0 0.0
    %616 = vmatpush1.msra.mxu0 0.0
    %617 = vmatprep.subr.mxu0 0.0
    %618 = vmatpush1.msra.mxu0 0.0
    %619 = vmatprep.subr.mxu0 0.0
    %620 = vmatpush1.msra.mxu0 0.0
    %621 = vmatprep.subr.mxu0 0.0
    %622 = vmatpush1.msra.mxu0 0.0
    %623 = vmatprep.mubr.f32.mxu0 0.0
    %624 = vmatmul.mubr.f32.gmra.mrb[0].mxu0 %v143
    %v625 = vpop.f32.mrb[0].mxu0
    %v626 = vadd.f32 0.0, %v625
    %v627 = vpop.f32.mrb[0].mxu0
    %628 = vmatprep.mubr.f32.mxu0 0.0
    %629 = vmatmul.mubr.f32.gmra.mrb[0].mxu0 %v146
    %v630 = vpop.f32.mrb[0].mxu0
    %v631 = vadd.f32 0.0, %v630
    %v632 = vpop.f32.mrb[0].mxu0
    %633 = vdwg.mxu0
    %s634 = scalar_lea.vmem [#allocation5], 32
    %v635 = vld [vmem:[%s634] sm:$0xff]
    %v636 = vld [vmem:[%s634 + $0x8] sm:$0xff]
    %v638 = vsel %vm304, %v635, 0
    %v641 = vsel %vm304, %v636, 0
    %643 = vmatprep.subr.mxu0 0.0
    %644 = vmatpush1.msra.mxu0 %v626
    %645 = vmatprep.subr.mxu0 0.0
    %646 = vmatpush1.msra.mxu0 %v631
    %647 = vmatprep.subr.mxu0 0.0
    %648 = vmatpush1.msra.mxu0 0.0
    %649 = vmatprep.subr.mxu0 0.0
    %650 = vmatpush1.msra.mxu0 0.0
    %651 = vmatprep.subr.mxu0 0.0
    %652 = vmatpush1.msra.mxu0 0.0
    %653 = vmatprep.subr.mxu0 0.0
    %654 = vmatpush1.msra.mxu0 0.0
    %655 = vmatprep.subr.mxu0 0.0
    %656 = vmatpush1.msra.mxu0 0.0
    %657 = vmatprep.subr.mxu0 0.0
    %658 = vmatpush1.msra.mxu0 0.0
    %659 = vmatprep.subr.mxu0 0.0
    %660 = vmatpush1.msra.mxu0 0.0
    %661 = vmatprep.subr.mxu0 0.0
    %662 = vmatpush1.msra.mxu0 0.0
    %663 = vmatprep.subr.mxu0 0.0
    %664 = vmatpush1.msra.mxu0 0.0
    %665 = vmatprep.subr.mxu0 0.0
    %666 = vmatpush1.msra.mxu0 0.0
    %667 = vmatprep.subr.mxu0 0.0
    %668 = vmatpush1.msra.mxu0 0.0
    %669 = vmatprep.subr.mxu0 0.0
    %670 = vmatpush1.msra.mxu0 0.0
    %671 = vmatprep.subr.mxu0 0.0
    %672 = vmatpush1.msra.mxu0 0.0
    %673 = vmatprep.subr.mxu0 0.0
    %674 = vmatpush1.msra.mxu0 0.0
    %675 = vmatprep.subr.mxu0 0.0
    %676 = vmatpush1.msra.mxu0 0.0
    %677 = vmatprep.subr.mxu0 0.0
    %678 = vmatpush1.msra.mxu0 0.0
    %679 = vmatprep.subr.mxu0 0.0
    %680 = vmatpush1.msra.mxu0 0.0
    %681 = vmatprep.subr.mxu0 0.0
    %682 = vmatpush1.msra.mxu0 0.0
    %683 = vmatprep.subr.mxu0 0.0
    %684 = vmatpush1.msra.mxu0 0.0
    %685 = vmatprep.subr.mxu0 0.0
    %686 = vmatpush1.msra.mxu0 0.0
    %687 = vmatprep.subr.mxu0 0.0
    %688 = vmatpush1.msra.mxu0 0.0
    %689 = vmatprep.subr.mxu0 0.0
    %690 = vmatpush1.msra.mxu0 0.0
    %691 = vmatprep.subr.mxu0 0.0
    %692 = vmatpush1.msra.mxu0 0.0
    %693 = vmatprep.subr.mxu0 0.0
    %694 = vmatpush1.msra.mxu0 0.0
    %695 = vmatprep.subr.mxu0 0.0
    %696 = vmatpush1.msra.mxu0 0.0
    %697 = vmatprep.subr.mxu0 0.0
    %698 = vmatpush1.msra.mxu0 0.0
    %699 = vmatprep.subr.mxu0 0.0
    %700 = vmatpush1.msra.mxu0 0.0
    %701 = vmatprep.subr.mxu0 0.0
    %702 = vmatpush1.msra.mxu0 0.0
    %703 = vmatprep.subr.mxu0 0.0
    %704 = vmatpush1.msra.mxu0 0.0
    %705 = vmatprep.subr.mxu0 0.0
    %706 = vmatpush1.msra.mxu0 0.0
    %707 = vmatprep.mubr.f32.mxu0 0.0
    %708 = vmatmul.mubr.f32.gmra.mrb[0].mxu0 %v638
    %v709 = vpop.f32.mrb[0].mxu0
    %v710 = vadd.f32 0.0, %v709
    %v711 = vpop.f32.mrb[0].mxu0
    %712 = vmatprep.mubr.f32.mxu0 0.0
    %713 = vmatmul.mubr.f32.gmra.mrb[0].mxu0 %v641
    %v714 = vpop.f32.mrb[0].mxu0
    %v715 = vadd.f32 0.0, %v714
    %v716 = vpop.f32.mrb[0].mxu0
    %717 = vdwg.mxu0
    %v718 = vadd.f32 %v552, %v710
    %v719 = vadd.f32 %v553, %v715
    %s720 = scalar_lea.vmem [#allocation8], 96
    %v721 = vld [vmem:[%s720] sm:$0xff]
    %v722 = vld [vmem:[%s720 + $0x8] sm:$0xff]
    %v723 = vld [vmem:[%s720 + $0x10] sm:$0xff]
    %v724 = vld [vmem:[%s720 + $0x18] sm:$0xff]
    %725 = vmatprep.subr.mxu0 0.0
    %726 = vmatpush1.msra.mxu0 %v721
    %727 = vmatprep.subr.mxu0 0.0
    %728 = vmatpush1.msra.mxu0 %v722
    %729 = vmatprep.subr.mxu0 0.0
    %730 = vmatpush1.msra.mxu0 %v723
    %731 = vmatprep.subr.mxu0 0.0
    %732 = vmatpush1.msra.mxu0 %v724
    %733 = vmatprep.subr.mxu0 0.0
    %734 = vmatpush1.msra.mxu0 0.0
    %735 = vmatprep.subr.mxu0 0.0
    %736 = vmatpush1.msra.mxu0 0.0
    %737 = vmatprep.subr.mxu0 0.0
    %738 = vmatpush1.msra.mxu0 0.0
    %739 = vmatprep.subr.mxu0 0.0
    %740 = vmatpush1.msra.mxu0 0.0
    %741 = vmatprep.subr.mxu0 0.0
    %742 = vmatpush1.msra.mxu0 0.0
    %743 = vmatprep.subr.mxu0 0.0
    %744 = vmatpush1.msra.mxu0 0.0
    %745 = vmatprep.subr.mxu0 0.0
    %746 = vmatpush1.msra.mxu0 0.0
    %747 = vmatprep.subr.mxu0 0.0
    %748 = vmatpush1.msra.mxu0 0.0
    %749 = vmatprep.subr.mxu0 0.0
    %750 = vmatpush1.msra.mxu0 0.0
    %751 = vmatprep.subr.mxu0 0.0
    %752 = vmatpush1.msra.mxu0 0.0
    %753 = vmatprep.subr.mxu0 0.0
    %754 = vmatpush1.msra.mxu0 0.0
    %755 = vmatprep.subr.mxu0 0.0
    %756 = vmatpush1.msra.mxu0 0.0
    %757 = vmatprep.subr.mxu0 0.0
    %758 = vmatpush1.msra.mxu0 0.0
    %759 = vmatprep.subr.mxu0 0.0
    %760 = vmatpush1.msra.mxu0 0.0
    %761 = vmatprep.subr.mxu0 0.0
    %762 = vmatpush1.msra.mxu0 0.0
    %763 = vmatprep.subr.mxu0 0.0
    %764 = vmatpush1.msra.mxu0 0.0
    %765 = vmatprep.subr.mxu0 0.0
    %766 = vmatpush1.msra.mxu0 0.0
    %767 = vmatprep.subr.mxu0 0.0
    %768 = vmatpush1.msra.mxu0 0.0
    %769 = vmatprep.subr.mxu0 0.0
    %770 = vmatpush1.msra.mxu0 0.0
    %771 = vmatprep.subr.mxu0 0.0
    %772 = vmatpush1.msra.mxu0 0.0
    %773 = vmatprep.subr.mxu0 0.0
    %774 = vmatpush1.msra.mxu0 0.0
    %775 = vmatprep.subr.mxu0 0.0
    %776 = vmatpush1.msra.mxu0 0.0
    %777 = vmatprep.subr.mxu0 0.0
    %778 = vmatpush1.msra.mxu0 0.0
    %779 = vmatprep.subr.mxu0 0.0
    %780 = vmatpush1.msra.mxu0 0.0
    %781 = vmatprep.subr.mxu0 0.0
    %782 = vmatpush1.msra.mxu0 0.0
    %783 = vmatprep.subr.mxu0 0.0
    %784 = vmatpush1.msra.mxu0 0.0
    %785 = vmatprep.subr.mxu0 0.0
    %786 = vmatpush1.msra.mxu0 0.0
    %787 = vmatprep.subr.mxu0 0.0
    %788 = vmatpush1.msra.mxu0 0.0
    %789 = vmatprep.mubr.f32.mxu0 0.0
    %790 = vmatmul.mubr.f32.gmra.mrb[0].mxu0 %v143
    %v791 = vpop.f32.mrb[0].mxu0
    %v792 = vadd.f32 0.0, %v791
    %v793 = vpop.f32.mrb[0].mxu0
    %794 = vmatprep.mubr.f32.mxu0 0.0
    %795 = vmatmul.mubr.f32.gmra.mrb[0].mxu0 %v146
    %v796 = vpop.f32.mrb[0].mxu0
    %v797 = vadd.f32 0.0, %v796
    %v798 = vpop.f32.mrb[0].mxu0
    %799 = vdwg.mxu0
    %s800 = scalar_lea.vmem [#allocation5], 48
    %v801 = vld [vmem:[%s800] sm:$0xff]
    %v802 = vld [vmem:[%s800 + $0x8] sm:$0xff]
    %v804 = vsel %vm304, %v801, 0
    %v807 = vsel %vm304, %v802, 0
    %809 = vmatprep.subr.mxu0 0.0
    %810 = vmatpush1.msra.mxu0 %v792
    %811 = vmatprep.subr.mxu0 0.0
    %812 = vmatpush1.msra.mxu0 %v797
    %813 = vmatprep.subr.mxu0 0.0
    %814 = vmatpush1.msra.mxu0 0.0
    %815 = vmatprep.subr.mxu0 0.0
    %816 = vmatpush1.msra.mxu0 0.0
    %817 = vmatprep.subr.mxu0 0.0
    %818 = vmatpush1.msra.mxu0 0.0
    %819 = vmatprep.subr.mxu0 0.0
    %820 = vmatpush1.msra.mxu0 0.0
    %821 = vmatprep.subr.mxu0 0.0
    %822 = vmatpush1.msra.mxu0 0.0
    %823 = vmatprep.subr.mxu0 0.0
    %824 = vmatpush1.msra.mxu0 0.0
    %825 = vmatprep.subr.mxu0 0.0
    %826 = vmatpush1.msra.mxu0 0.0
    %827 = vmatprep.subr.mxu0 0.0
    %828 = vmatpush1.msra.mxu0 0.0
    %829 = vmatprep.subr.mxu0 0.0
    %830 = vmatpush1.msra.mxu0 0.0
    %831 = vmatprep.subr.mxu0 0.0
    %832 = vmatpush1.msra.mxu0 0.0
    %833 = vmatprep.subr.mxu0 0.0
    %834 = vmatpush1.msra.mxu0 0.0
    %835 = vmatprep.subr.mxu0 0.0
    %836 = vmatpush1.msra.mxu0 0.0
    %837 = vmatprep.subr.mxu0 0.0
    %838 = vmatpush1.msra.mxu0 0.0
    %839 = vmatprep.subr.mxu0 0.0
    %840 = vmatpush1.msra.mxu0 0.0
    %841 = vmatprep.subr.mxu0 0.0
    %842 = vmatpush1.msra.mxu0 0.0
    %843 = vmatprep.subr.mxu0 0.0
    %844 = vmatpush1.msra.mxu0 0.0
    %845 = vmatprep.subr.mxu0 0.0
    %846 = vmatpush1.msra.mxu0 0.0
    %847 = vmatprep.subr.mxu0 0.0
    %848 = vmatpush1.msra.mxu0 0.0
    %849 = vmatprep.subr.mxu0 0.0
    %850 = vmatpush1.msra.mxu0 0.0
    %851 = vmatprep.subr.mxu0 0.0
    %852 = vmatpush1.msra.mxu0 0.0
    %853 = vmatprep.subr.mxu0 0.0
    %854 = vmatpush1.msra.mxu0 0.0
    %855 = vmatprep.subr.mxu0 0.0
    %856 = vmatpush1.msra.mxu0 0.0
    %857 = vmatprep.subr.mxu0 0.0
    %858 = vmatpush1.msra.mxu0 0.0
    %859 = vmatprep.subr.mxu0 0.0
    %860 = vmatpush1.msra.mxu0 0.0
    %861 = vmatprep.subr.mxu0 0.0
    %862 = vmatpush1.msra.mxu0 0.0
    %863 = vmatprep.subr.mxu0 0.0
    %864 = vmatpush1.msra.mxu0 0.0
    %865 = vmatprep.subr.mxu0 0.0
    %866 = vmatpush1.msra.mxu0 0.0
    %867 = vmatprep.subr.mxu0 0.0
    %868 = vmatpush1.msra.mxu0 0.0
    %869 = vmatprep.subr.mxu0 0.0
    %870 = vmatpush1.msra.mxu0 0.0
    %871 = vmatprep.subr.mxu0 0.0
    %872 = vmatpush1.msra.mxu0 0.0
    %873 = vmatprep.mubr.f32.mxu0 0.0
    %874 = vmatmul.mubr.f32.gmra.mrb[0].mxu0 %v804
    %v875 = vpop.f32.mrb[0].mxu0
    %v876 = vadd.f32 0.0, %v875
    %v877 = vpop.f32.mrb[0].mxu0
    %878 = vmatprep.mubr.f32.mxu0 0.0
    %879 = vmatmul.mubr.f32.gmra.mrb[0].mxu0 %v807
    %v880 = vpop.f32.mrb[0].mxu0
    %v881 = vadd.f32 0.0, %v880
    %v882 = vpop.f32.mrb[0].mxu0
    %883 = vdwg.mxu0
    %v884 = vadd.f32 %v718, %v876
    %v885 = vadd.f32 %v719, %v881
    %s886 = scalar_lea.vmem [#allocation8], 128
    %v887 = vld [vmem:[%s886] sm:$0xff]
    %v888 = vld [vmem:[%s886 + $0x8] sm:$0xff]
    %v889 = vld [vmem:[%s886 + $0x10] sm:$0xff]
    %v890 = vld [vmem:[%s886 + $0x18] sm:$0xff]
    %891 = vmatprep.subr.mxu0 0.0
    %892 = vmatpush1.msra.mxu0 %v887
    %893 = vmatprep.subr.mxu0 0.0
    %894 = vmatpush1.msra.mxu0 %v888
    %895 = vmatprep.subr.mxu0 0.0
    %896 = vmatpush1.msra.mxu0 %v889
    %897 = vmatprep.subr.mxu0 0.0
    %898 = vmatpush1.msra.mxu0 %v890
    %899 = vmatprep.subr.mxu0 0.0
    %900 = vmatpush1.msra.mxu0 0.0
    %901 = vmatprep.subr.mxu0 0.0
    %902 = vmatpush1.msra.mxu0 0.0
    %903 = vmatprep.subr.mxu0 0.0
    %904 = vmatpush1.msra.mxu0 0.0
    %905 = vmatprep.subr.mxu0 0.0
    %906 = vmatpush1.msra.mxu0 0.0
    %907 = vmatprep.subr.mxu0 0.0
    %908 = vmatpush1.msra.mxu0 0.0
    %909 = vmatprep.subr.mxu0 0.0
    %910 = vmatpush1.msra.mxu0 0.0
    %911 = vmatprep.subr.mxu0 0.0
    %912 = vmatpush1.msra.mxu0 0.0
    %913 = vmatprep.subr.mxu0 0.0
    %914 = vmatpush1.msra.mxu0 0.0
    %915 = vmatprep.subr.mxu0 0.0
    %916 = vmatpush1.msra.mxu0 0.0
    %917 = vmatprep.subr.mxu0 0.0
    %918 = vmatpush1.msra.mxu0 0.0
    %919 = vmatprep.subr.mxu0 0.0
    %920 = vmatpush1.msra.mxu0 0.0
    %921 = vmatprep.subr.mxu0 0.0
    %922 = vmatpush1.msra.mxu0 0.0
    %923 = vmatprep.subr.mxu0 0.0
    %924 = vmatpush1.msra.mxu0 0.0
    %925 = vmatprep.subr.mxu0 0.0
    %926 = vmatpush1.msra.mxu0 0.0
    %927 = vmatprep.subr.mxu0 0.0
    %928 = vmatpush1.msra.mxu0 0.0
    %929 = vmatprep.subr.mxu0 0.0
    %930 = vmatpush1.msra.mxu0 0.0
    %931 = vmatprep.subr.mxu0 0.0
    %932 = vmatpush1.msra.mxu0 0.0
    %933 = vmatprep.subr.mxu0 0.0
    %934 = vmatpush1.msra.mxu0 0.0
    %935 = vmatprep.subr.mxu0 0.0
    %936 = vmatpush1.msra.mxu0 0.0
    %937 = vmatprep.subr.mxu0 0.0
    %938 = vmatpush1.msra.mxu0 0.0
    %939 = vmatprep.subr.mxu0 0.0
    %940 = vmatpush1.msra.mxu0 0.0
    %941 = vmatprep.subr.mxu0 0.0
    %942 = vmatpush1.msra.mxu0 0.0
    %943 = vmatprep.subr.mxu0 0.0
    %944 = vmatpush1.msra.mxu0 0.0
    %945 = vmatprep.subr.mxu0 0.0
    %946 = vmatpush1.msra.mxu0 0.0
    %947 = vmatprep.subr.mxu0 0.0
    %948 = vmatpush1.msra.mxu0 0.0
    %949 = vmatprep.subr.mxu0 0.0
    %950 = vmatpush1.msra.mxu0 0.0
    %951 = vmatprep.subr.mxu0 0.0
    %952 = vmatpush1.msra.mxu0 0.0
    %953 = vmatprep.subr.mxu0 0.0
    %954 = vmatpush1.msra.mxu0 0.0
    %955 = vmatprep.mubr.f32.mxu0 0.0
    %956 = vmatmul.mubr.f32.gmra.mrb[0].mxu0 %v143
    %v957 = vpop.f32.mrb[0].mxu0
    %v958 = vadd.f32 0.0, %v957
    %v959 = vpop.f32.mrb[0].mxu0
    %960 = vmatprep.mubr.f32.mxu0 0.0
    %961 = vmatmul.mubr.f32.gmra.mrb[0].mxu0 %v146
    %v962 = vpop.f32.mrb[0].mxu0
    %v963 = vadd.f32 0.0, %v962
    %v964 = vpop.f32.mrb[0].mxu0
    %965 = vdwg.mxu0
    %s966 = scalar_lea.vmem [#allocation5], 64
    %v967 = vld [vmem:[%s966] sm:$0xff]
    %v968 = vld [vmem:[%s966 + $0x8] sm:$0xff]
    %v970 = vsel %vm304, %v967, 0
    %v973 = vsel %vm304, %v968, 0
    %975 = vmatprep.subr.mxu0 0.0
    %976 = vmatpush1.msra.mxu0 %v958
    %977 = vmatprep.subr.mxu0 0.0
    %978 = vmatpush1.msra.mxu0 %v963
    %979 = vmatprep.subr.mxu0 0.0
    %980 = vmatpush1.msra.mxu0 0.0
    %981 = vmatprep.subr.mxu0 0.0
    %982 = vmatpush1.msra.mxu0 0.0
    %983 = vmatprep.subr.mxu0 0.0
    %984 = vmatpush1.msra.mxu0 0.0
    %985 = vmatprep.subr.mxu0 0.0
    %986 = vmatpush1.msra.mxu0 0.0
    %987 = vmatprep.subr.mxu0 0.0
    %988 = vmatpush1.msra.mxu0 0.0
    %989 = vmatprep.subr.mxu0 0.0
    %990 = vmatpush1.msra.mxu0 0.0
    %991 = vmatprep.subr.mxu0 0.0
    %992 = vmatpush1.msra.mxu0 0.0
    %993 = vmatprep.subr.mxu0 0.0
    %994 = vmatpush1.msra.mxu0 0.0
    %995 = vmatprep.subr.mxu0 0.0
    %996 = vmatpush1.msra.mxu0 0.0
    %997 = vmatprep.subr.mxu0 0.0
    %998 = vmatpush1.msra.mxu0 0.0
    %999 = vmatprep.subr.mxu0 0.0
    %1000 = vmatpush1.msra.mxu0 0.0
    %1001 = vmatprep.subr.mxu0 0.0
    %1002 = vmatpush1.msra.mxu0 0.0
    %1003 = vmatprep.subr.mxu0 0.0
    %1004 = vmatpush1.msra.mxu0 0.0
    %1005 = vmatprep.subr.mxu0 0.0
    %1006 = vmatpush1.msra.mxu0 0.0
    %1007 = vmatprep.subr.mxu0 0.0
    %1008 = vmatpush1.msra.mxu0 0.0
    %1009 = vmatprep.subr.mxu0 0.0
    %1010 = vmatpush1.msra.mxu0 0.0
    %1011 = vmatprep.subr.mxu0 0.0
    %1012 = vmatpush1.msra.mxu0 0.0
    %1013 = vmatprep.subr.mxu0 0.0
    %1014 = vmatpush1.msra.mxu0 0.0
    %1015 = vmatprep.subr.mxu0 0.0
    %1016 = vmatpush1.msra.mxu0 0.0
    %1017 = vmatprep.subr.mxu0 0.0
    %1018 = vmatpush1.msra.mxu0 0.0
    %1019 = vmatprep.subr.mxu0 0.0
    %1020 = vmatpush1.msra.mxu0 0.0
    %1021 = vmatprep.subr.mxu0 0.0
    %1022 = vmatpush1.msra.mxu0 0.0
    %1023 = vmatprep.subr.mxu0 0.0
    %1024 = vmatpush1.msra.mxu0 0.0
    %1025 = vmatprep.subr.mxu0 0.0
    %1026 = vmatpush1.msra.mxu0 0.0
    %1027 = vmatprep.subr.mxu0 0.0
    %1028 = vmatpush1.msra.mxu0 0.0
    %1029 = vmatprep.subr.mxu0 0.0
    %1030 = vmatpush1.msra.mxu0 0.0
    %1031 = vmatprep.subr.mxu0 0.0
    %1032 = vmatpush1.msra.mxu0 0.0
    %1033 = vmatprep.subr.mxu0 0.0
    %1034 = vmatpush1.msra.mxu0 0.0
    %1035 = vmatprep.subr.mxu0 0.0
    %1036 = vmatpush1.msra.mxu0 0.0
    %1037 = vmatprep.subr.mxu0 0.0
    %1038 = vmatpush1.msra.mxu0 0.0
    %1039 = vmatprep.mubr.f32.mxu0 0.0
    %1040 = vmatmul.mubr.f32.gmra.mrb[0].mxu0 %v970
    %v1041 = vpop.f32.mrb[0].mxu0
    %v1042 = vadd.f32 0.0, %v1041
    %v1043 = vpop.f32.mrb[0].mxu0
    %1044 = vmatprep.mubr.f32.mxu0 0.0
    %1045 = vmatmul.mubr.f32.gmra.mrb[0].mxu0 %v973
    %v1046 = vpop.f32.mrb[0].mxu0
    %v1047 = vadd.f32 0.0, %v1046
    %v1048 = vpop.f32.mrb[0].mxu0
    %1049 = vdwg.mxu0
    %v1050 = vadd.f32 %v884, %v1042
    %v1051 = vadd.f32 %v885, %v1047
    %s1052 = scalar_lea.vmem [#allocation8], 160
    %v1053 = vld [vmem:[%s1052] sm:$0xff]
    %v1054 = vld [vmem:[%s1052 + $0x8] sm:$0xff]
    %v1055 = vld [vmem:[%s1052 + $0x10] sm:$0xff]
    %v1056 = vld [vmem:[%s1052 + $0x18] sm:$0xff]
    %1057 = vmatprep.subr.mxu0 0.0
    %1058 = vmatpush1.msra.mxu0 %v1053
    %1059 = vmatprep.subr.mxu0 0.0
    %1060 = vmatpush1.msra.mxu0 %v1054
    %1061 = vmatprep.subr.mxu0 0.0
    %1062 = vmatpush1.msra.mxu0 %v1055
    %1063 = vmatprep.subr.mxu0 0.0
    %1064 = vmatpush1.msra.mxu0 %v1056
    %1065 = vmatprep.subr.mxu0 0.0
    %1066 = vmatpush1.msra.mxu0 0.0
    %1067 = vmatprep.subr.mxu0 0.0
    %1068 = vmatpush1.msra.mxu0 0.0
    %1069 = vmatprep.subr.mxu0 0.0
    %1070 = vmatpush1.msra.mxu0 0.0
    %1071 = vmatprep.subr.mxu0 0.0
    %1072 = vmatpush1.msra.mxu0 0.0
    %1073 = vmatprep.subr.mxu0 0.0
    %1074 = vmatpush1.msra.mxu0 0.0
    %1075 = vmatprep.subr.mxu0 0.0
    %1076 = vmatpush1.msra.mxu0 0.0
    %1077 = vmatprep.subr.mxu0 0.0
    %1078 = vmatpush1.msra.mxu0 0.0
    %1079 = vmatprep.subr.mxu0 0.0
    %1080 = vmatpush1.msra.mxu0 0.0
    %1081 = vmatprep.subr.mxu0 0.0
    %1082 = vmatpush1.msra.mxu0 0.0
    %1083 = vmatprep.subr.mxu0 0.0
    %1084 = vmatpush1.msra.mxu0 0.0
    %1085 = vmatprep.subr.mxu0 0.0
    %1086 = vmatpush1.msra.mxu0 0.0
    %1087 = vmatprep.subr.mxu0 0.0
    %1088 = vmatpush1.msra.mxu0 0.0
    %1089 = vmatprep.subr.mxu0 0.0
    %1090 = vmatpush1.msra.mxu0 0.0
    %1091 = vmatprep.subr.mxu0 0.0
    %1092 = vmatpush1.msra.mxu0 0.0
    %1093 = vmatprep.subr.mxu0 0.0
    %1094 = vmatpush1.msra.mxu0 0.0
    %1095 = vmatprep.subr.mxu0 0.0
    %1096 = vmatpush1.msra.mxu0 0.0
    %1097 = vmatprep.subr.mxu0 0.0
    %1098 = vmatpush1.msra.mxu0 0.0
    %1099 = vmatprep.subr.mxu0 0.0
    %1100 = vmatpush1.msra.mxu0 0.0
    %1101 = vmatprep.subr.mxu0 0.0
    %1102 = vmatpush1.msra.mxu0 0.0
    %1103 = vmatprep.subr.mxu0 0.0
    %1104 = vmatpush1.msra.mxu0 0.0
    %1105 = vmatprep.subr.mxu0 0.0
    %1106 = vmatpush1.msra.mxu0 0.0
    %1107 = vmatprep.subr.mxu0 0.0
    %1108 = vmatpush1.msra.mxu0 0.0
    %1109 = vmatprep.subr.mxu0 0.0
    %1110 = vmatpush1.msra.mxu0 0.0
    %1111 = vmatprep.subr.mxu0 0.0
    %1112 = vmatpush1.msra.mxu0 0.0
    %1113 = vmatprep.subr.mxu0 0.0
    %1114 = vmatpush1.msra.mxu0 0.0
    %1115 = vmatprep.subr.mxu0 0.0
    %1116 = vmatpush1.msra.mxu0 0.0
    %1117 = vmatprep.subr.mxu0 0.0
    %1118 = vmatpush1.msra.mxu0 0.0
    %1119 = vmatprep.subr.mxu0 0.0
    %1120 = vmatpush1.msra.mxu0 0.0
    %1121 = vmatprep.mubr.f32.mxu0 0.0
    %1122 = vmatmul.mubr.f32.gmra.mrb[0].mxu0 %v143
    %v1123 = vpop.f32.mrb[0].mxu0
    %v1124 = vadd.f32 0.0, %v1123
    %v1125 = vpop.f32.mrb[0].mxu0
    %1126 = vmatprep.mubr.f32.mxu0 0.0
    %1127 = vmatmul.mubr.f32.gmra.mrb[0].mxu0 %v146
    %v1128 = vpop.f32.mrb[0].mxu0
    %v1129 = vadd.f32 0.0, %v1128
    %v1130 = vpop.f32.mrb[0].mxu0
    %1131 = vdwg.mxu0
    %s1132 = scalar_lea.vmem [#allocation5], 80
    %v1133 = vld [vmem:[%s1132] sm:$0xff]
    %v1134 = vld [vmem:[%s1132 + $0x8] sm:$0xff]
    %v1136 = vsel %vm304, %v1133, 0
    %v1139 = vsel %vm304, %v1134, 0
    %1141 = vmatprep.subr.mxu0 0.0
    %1142 = vmatpush1.msra.mxu0 %v1124
    %1143 = vmatprep.subr.mxu0 0.0
    %1144 = vmatpush1.msra.mxu0 %v1129
    %1145 = vmatprep.subr.mxu0 0.0
    %1146 = vmatpush1.msra.mxu0 0.0
    %1147 = vmatprep.subr.mxu0 0.0
    %1148 = vmatpush1.msra.mxu0 0.0
    %1149 = vmatprep.subr.mxu0 0.0
    %1150 = vmatpush1.msra.mxu0 0.0
    %1151 = vmatprep.subr.mxu0 0.0
    %1152 = vmatpush1.msra.mxu0 0.0
    %1153 = vmatprep.subr.mxu0 0.0
    %1154 = vmatpush1.msra.mxu0 0.0
    %1155 = vmatprep.subr.mxu0 0.0
    %1156 = vmatpush1.msra.mxu0 0.0
    %1157 = vmatprep.subr.mxu0 0.0
    %1158 = vmatpush1.msra.mxu0 0.0
    %1159 = vmatprep.subr.mxu0 0.0
    %1160 = vmatpush1.msra.mxu0 0.0
    %1161 = vmatprep.subr.mxu0 0.0
    %1162 = vmatpush1.msra.mxu0 0.0
    %1163 = vmatprep.subr.mxu0 0.0
    %1164 = vmatpush1.msra.mxu0 0.0
    %1165 = vmatprep.subr.mxu0 0.0
    %1166 = vmatpush1.msra.mxu0 0.0
    %1167 = vmatprep.subr.mxu0 0.0
    %1168 = vmatpush1.msra.mxu0 0.0
    %1169 = vmatprep.subr.mxu0 0.0
    %1170 = vmatpush1.msra.mxu0 0.0
    %1171 = vmatprep.subr.mxu0 0.0
    %1172 = vmatpush1.msra.mxu0 0.0
    %1173 = vmatprep.subr.mxu0 0.0
    %1174 = vmatpush1.msra.mxu0 0.0
    %1175 = vmatprep.subr.mxu0 0.0
    %1176 = vmatpush1.msra.mxu0 0.0
    %1177 = vmatprep.subr.mxu0 0.0
    %1178 = vmatpush1.msra.mxu0 0.0
    %1179 = vmatprep.subr.mxu0 0.0
    %1180 = vmatpush1.msra.mxu0 0.0
    %1181 = vmatprep.subr.mxu0 0.0
    %1182 = vmatpush1.msra.mxu0 0.0
    %1183 = vmatprep.subr.mxu0 0.0
    %1184 = vmatpush1.msra.mxu0 0.0
    %1185 = vmatprep.subr.mxu0 0.0
    %1186 = vmatpush1.msra.mxu0 0.0
    %1187 = vmatprep.subr.mxu0 0.0
    %1188 = vmatpush1.msra.mxu0 0.0
    %1189 = vmatprep.subr.mxu0 0.0
    %1190 = vmatpush1.msra.mxu0 0.0
    %1191 = vmatprep.subr.mxu0 0.0
    %1192 = vmatpush1.msra.mxu0 0.0
    %1193 = vmatprep.subr.mxu0 0.0
    %1194 = vmatpush1.msra.mxu0 0.0
    %1195 = vmatprep.subr.mxu0 0.0
    %1196 = vmatpush1.msra.mxu0 0.0
    %1197 = vmatprep.subr.mxu0 0.0
    %1198 = vmatpush1.msra.mxu0 0.0
    %1199 = vmatprep.subr.mxu0 0.0
    %1200 = vmatpush1.msra.mxu0 0.0
    %1201 = vmatprep.subr.mxu0 0.0
    %1202 = vmatpush1.msra.mxu0 0.0
    %1203 = vmatprep.subr.mxu0 0.0
    %1204 = vmatpush1.msra.mxu0 0.0
    %1205 = vmatprep.mubr.f32.mxu0 0.0
    %1206 = vmatmul.mubr.f32.gmra.mrb[0].mxu0 %v1136
    %v1207 = vpop.f32.mrb[0].mxu0
    %v1208 = vadd.f32 0.0, %v1207
    %v1209 = vpop.f32.mrb[0].mxu0
    %1210 = vmatprep.mubr.f32.mxu0 0.0
    %1211 = vmatmul.mubr.f32.gmra.mrb[0].mxu0 %v1139
    %v1212 = vpop.f32.mrb[0].mxu0
    %v1213 = vadd.f32 0.0, %v1212
    %v1214 = vpop.f32.mrb[0].mxu0
    %1215 = vdwg.mxu0
    %v1216 = vadd.f32 %v1050, %v1208
    %v1217 = vadd.f32 %v1051, %v1213
    %s1218 = scalar_lea.vmem [#allocation8], 192
    %v1219 = vld [vmem:[%s1218] sm:$0xff]
    %v1220 = vld [vmem:[%s1218 + $0x8] sm:$0xff]
    %v1221 = vld [vmem:[%s1218 + $0x10] sm:$0xff]
    %v1222 = vld [vmem:[%s1218 + $0x18] sm:$0xff]
    %1223 = vmatprep.subr.mxu0 0.0
    %1224 = vmatpush1.msra.mxu0 %v1219
    %1225 = vmatprep.subr.mxu0 0.0
    %1226 = vmatpush1.msra.mxu0 %v1220
    %1227 = vmatprep.subr.mxu0 0.0
    %1228 = vmatpush1.msra.mxu0 %v1221
    %1229 = vmatprep.subr.mxu0 0.0
    %1230 = vmatpush1.msra.mxu0 %v1222
    %1231 = vmatprep.subr.mxu0 0.0
    %1232 = vmatpush1.msra.mxu0 0.0
    %1233 = vmatprep.subr.mxu0 0.0
    %1234 = vmatpush1.msra.mxu0 0.0
    %1235 = vmatprep.subr.mxu0 0.0
    %1236 = vmatpush1.msra.mxu0 0.0
    %1237 = vmatprep.subr.mxu0 0.0
    %1238 = vmatpush1.msra.mxu0 0.0
    %1239 = vmatprep.subr.mxu0 0.0
    %1240 = vmatpush1.msra.mxu0 0.0
    %1241 = vmatprep.subr.mxu0 0.0
    %1242 = vmatpush1.msra.mxu0 0.0
    %1243 = vmatprep.subr.mxu0 0.0
    %1244 = vmatpush1.msra.mxu0 0.0
    %1245 = vmatprep.subr.mxu0 0.0
    %1246 = vmatpush1.msra.mxu0 0.0
    %1247 = vmatprep.subr.mxu0 0.0
    %1248 = vmatpush1.msra.mxu0 0.0
    %1249 = vmatprep.subr.mxu0 0.0
    %1250 = vmatpush1.msra.mxu0 0.0
    %1251 = vmatprep.subr.mxu0 0.0
    %1252 = vmatpush1.msra.mxu0 0.0
    %1253 = vmatprep.subr.mxu0 0.0
    %1254 = vmatpush1.msra.mxu0 0.0
    %1255 = vmatprep.subr.mxu0 0.0
    %1256 = vmatpush1.msra.mxu0 0.0
    %1257 = vmatprep.subr.mxu0 0.0
    %1258 = vmatpush1.msra.mxu0 0.0
    %1259 = vmatprep.subr.mxu0 0.0
    %1260 = vmatpush1.msra.mxu0 0.0
    %1261 = vmatprep.subr.mxu0 0.0
    %1262 = vmatpush1.msra.mxu0 0.0
    %1263 = vmatprep.subr.mxu0 0.0
    %1264 = vmatpush1.msra.mxu0 0.0
    %1265 = vmatprep.subr.mxu0 0.0
    %1266 = vmatpush1.msra.mxu0 0.0
    %1267 = vmatprep.subr.mxu0 0.0
    %1268 = vmatpush1.msra.mxu0 0.0
    %1269 = vmatprep.subr.mxu0 0.0
    %1270 = vmatpush1.msra.mxu0 0.0
    %1271 = vmatprep.subr.mxu0 0.0
    %1272 = vmatpush1.msra.mxu0 0.0
    %1273 = vmatprep.subr.mxu0 0.0
    %1274 = vmatpush1.msra.mxu0 0.0
    %1275 = vmatprep.subr.mxu0 0.0
    %1276 = vmatpush1.msra.mxu0 0.0
    %1277 = vmatprep.subr.mxu0 0.0
    %1278 = vmatpush1.msra.mxu0 0.0
    %1279 = vmatprep.subr.mxu0 0.0
    %1280 = vmatpush1.msra.mxu0 0.0
    %1281 = vmatprep.subr.mxu0 0.0
    %1282 = vmatpush1.msra.mxu0 0.0
    %1283 = vmatprep.subr.mxu0 0.0
    %1284 = vmatpush1.msra.mxu0 0.0
    %1285 = vmatprep.subr.mxu0 0.0
    %1286 = vmatpush1.msra.mxu0 0.0
    %1287 = vmatprep.mubr.f32.mxu0 0.0
    %1288 = vmatmul.mubr.f32.gmra.mrb[0].mxu0 %v143
    %v1289 = vpop.f32.mrb[0].mxu0
    %v1290 = vadd.f32 0.0, %v1289
    %v1291 = vpop.f32.mrb[0].mxu0
    %1292 = vmatprep.mubr.f32.mxu0 0.0
    %1293 = vmatmul.mubr.f32.gmra.mrb[0].mxu0 %v146
    %v1294 = vpop.f32.mrb[0].mxu0
    %v1295 = vadd.f32 0.0, %v1294
    %v1296 = vpop.f32.mrb[0].mxu0
    %1297 = vdwg.mxu0
    %s1298 = scalar_lea.vmem [#allocation5], 96
    %v1299 = vld [vmem:[%s1298] sm:$0xff]
    %v1300 = vld [vmem:[%s1298 + $0x8] sm:$0xff]
    %v1302 = vsel %vm304, %v1299, 0
    %v1305 = vsel %vm304, %v1300, 0
    %1307 = vmatprep.subr.mxu0 0.0
    %1308 = vmatpush1.msra.mxu0 %v1290
    %1309 = vmatprep.subr.mxu0 0.0
    %1310 = vmatpush1.msra.mxu0 %v1295
    %1311 = vmatprep.subr.mxu0 0.0
    %1312 = vmatpush1.msra.mxu0 0.0
    %1313 = vmatprep.subr.mxu0 0.0
    %1314 = vmatpush1.msra.mxu0 0.0
    %1315 = vmatprep.subr.mxu0 0.0
    %1316 = vmatpush1.msra.mxu0 0.0
    %1317 = vmatprep.subr.mxu0 0.0
    %1318 = vmatpush1.msra.mxu0 0.0
    %1319 = vmatprep.subr.mxu0 0.0
    %1320 = vmatpush1.msra.mxu0 0.0
    %1321 = vmatprep.subr.mxu0 0.0
    %1322 = vmatpush1.msra.mxu0 0.0
    %1323 = vmatprep.subr.mxu0 0.0
    %1324 = vmatpush1.msra.mxu0 0.0
    %1325 = vmatprep.subr.mxu0 0.0
    %1326 = vmatpush1.msra.mxu0 0.0
    %1327 = vmatprep.subr.mxu0 0.0
    %1328 = vmatpush1.msra.mxu0 0.0
    %1329 = vmatprep.subr.mxu0 0.0
    %1330 = vmatpush1.msra.mxu0 0.0
    %1331 = vmatprep.subr.mxu0 0.0
    %1332 = vmatpush1.msra.mxu0 0.0
    %1333 = vmatprep.subr.mxu0 0.0
    %1334 = vmatpush1.msra.mxu0 0.0
    %1335 = vmatprep.subr.mxu0 0.0
    %1336 = vmatpush1.msra.mxu0 0.0
    %1337 = vmatprep.subr.mxu0 0.0
    %1338 = vmatpush1.msra.mxu0 0.0
    %1339 = vmatprep.subr.mxu0 0.0
    %1340 = vmatpush1.msra.mxu0 0.0
    %1341 = vmatprep.subr.mxu0 0.0
    %1342 = vmatpush1.msra.mxu0 0.0
    %1343 = vmatprep.subr.mxu0 0.0
    %1344 = vmatpush1.msra.mxu0 0.0
    %1345 = vmatprep.subr.mxu0 0.0
    %1346 = vmatpush1.msra.mxu0 0.0
    %1347 = vmatprep.subr.mxu0 0.0
    %1348 = vmatpush1.msra.mxu0 0.0
    %1349 = vmatprep.subr.mxu0 0.0
    %1350 = vmatpush1.msra.mxu0 0.0
    %1351 = vmatprep.subr.mxu0 0.0
    %1352 = vmatpush1.msra.mxu0 0.0
    %1353 = vmatprep.subr.mxu0 0.0
    %1354 = vmatpush1.msra.mxu0 0.0
    %1355 = vmatprep.subr.mxu0 0.0
    %1356 = vmatpush1.msra.mxu0 0.0
    %1357 = vmatprep.subr.mxu0 0.0
    %1358 = vmatpush1.msra.mxu0 0.0
    %1359 = vmatprep.subr.mxu0 0.0
    %1360 = vmatpush1.msra.mxu0 0.0
    %1361 = vmatprep.subr.mxu0 0.0
    %1362 = vmatpush1.msra.mxu0 0.0
    %1363 = vmatprep.subr.mxu0 0.0
    %1364 = vmatpush1.msra.mxu0 0.0
    %1365 = vmatprep.subr.mxu0 0.0
    %1366 = vmatpush1.msra.mxu0 0.0
    %1367 = vmatprep.subr.mxu0 0.0
    %1368 = vmatpush1.msra.mxu0 0.0
    %1369 = vmatprep.subr.mxu0 0.0
    %1370 = vmatpush1.msra.mxu0 0.0
    %1371 = vmatprep.mubr.f32.mxu0 0.0
    %1372 = vmatmul.mubr.f32.gmra.mrb[0].mxu0 %v1302
    %v1373 = vpop.f32.mrb[0].mxu0
    %v1374 = vadd.f32 0.0, %v1373
    %v1375 = vpop.f32.mrb[0].mxu0
    %1376 = vmatprep.mubr.f32.mxu0 0.0
    %1377 = vmatmul.mubr.f32.gmra.mrb[0].mxu0 %v1305
    %v1378 = vpop.f32.mrb[0].mxu0
    %v1379 = vadd.f32 0.0, %v1378
    %v1380 = vpop.f32.mrb[0].mxu0
    %1381 = vdwg.mxu0
    %v1382 = vadd.f32 %v1216, %v1374
    %v1383 = vadd.f32 %v1217, %v1379
    %s1384 = scalar_lea.vmem [#allocation8], 224
    %v1385 = vld [vmem:[%s1384] sm:$0xff]
    %v1386 = vld [vmem:[%s1384 + $0x8] sm:$0xff]
    %v1387 = vld [vmem:[%s1384 + $0x10] sm:$0xff]
    %v1388 = vld [vmem:[%s1384 + $0x18] sm:$0xff]
    %1389 = vmatprep.subr.mxu0 0.0
    %1390 = vmatpush1.msra.mxu0 %v1385
    %1391 = vmatprep.subr.mxu0 0.0
    %1392 = vmatpush1.msra.mxu0 %v1386
    %1393 = vmatprep.subr.mxu0 0.0
    %1394 = vmatpush1.msra.mxu0 %v1387
    %1395 = vmatprep.subr.mxu0 0.0
    %1396 = vmatpush1.msra.mxu0 %v1388
    %1397 = vmatprep.subr.mxu0 0.0
    %1398 = vmatpush1.msra.mxu0 0.0
    %1399 = vmatprep.subr.mxu0 0.0
    %1400 = vmatpush1.msra.mxu0 0.0
    %1401 = vmatprep.subr.mxu0 0.0
    %1402 = vmatpush1.msra.mxu0 0.0
    %1403 = vmatprep.subr.mxu0 0.0
    %1404 = vmatpush1.msra.mxu0 0.0
    %1405 = vmatprep.subr.mxu0 0.0
    %1406 = vmatpush1.msra.mxu0 0.0
    %1407 = vmatprep.subr.mxu0 0.0
    %1408 = vmatpush1.msra.mxu0 0.0
    %1409 = vmatprep.subr.mxu0 0.0
    %1410 = vmatpush1.msra.mxu0 0.0
    %1411 = vmatprep.subr.mxu0 0.0
    %1412 = vmatpush1.msra.mxu0 0.0
    %1413 = vmatprep.subr.mxu0 0.0
    %1414 = vmatpush1.msra.mxu0 0.0
    %1415 = vmatprep.subr.mxu0 0.0
    %1416 = vmatpush1.msra.mxu0 0.0
    %1417 = vmatprep.subr.mxu0 0.0
    %1418 = vmatpush1.msra.mxu0 0.0
    %1419 = vmatprep.subr.mxu0 0.0
    %1420 = vmatpush1.msra.mxu0 0.0
    %1421 = vmatprep.subr.mxu0 0.0
    %1422 = vmatpush1.msra.mxu0 0.0
    %1423 = vmatprep.subr.mxu0 0.0
    %1424 = vmatpush1.msra.mxu0 0.0
    %1425 = vmatprep.subr.mxu0 0.0
    %1426 = vmatpush1.msra.mxu0 0.0
    %1427 = vmatprep.subr.mxu0 0.0
    %1428 = vmatpush1.msra.mxu0 0.0
    %1429 = vmatprep.subr.mxu0 0.0
    %1430 = vmatpush1.msra.mxu0 0.0
    %1431 = vmatprep.subr.mxu0 0.0
    %1432 = vmatpush1.msra.mxu0 0.0
    %1433 = vmatprep.subr.mxu0 0.0
    %1434 = vmatpush1.msra.mxu0 0.0
    %1435 = vmatprep.subr.mxu0 0.0
    %1436 = vmatpush1.msra.mxu0 0.0
    %1437 = vmatprep.subr.mxu0 0.0
    %1438 = vmatpush1.msra.mxu0 0.0
    %1439 = vmatprep.subr.mxu0 0.0
    %1440 = vmatpush1.msra.mxu0 0.0
    %1441 = vmatprep.subr.mxu0 0.0
    %1442 = vmatpush1.msra.mxu0 0.0
    %1443 = vmatprep.subr.mxu0 0.0
    %1444 = vmatpush1.msra.mxu0 0.0
    %1445 = vmatprep.subr.mxu0 0.0
    %1446 = vmatpush1.msra.mxu0 0.0
    %1447 = vmatprep.subr.mxu0 0.0
    %1448 = vmatpush1.msra.mxu0 0.0
    %1449 = vmatprep.subr.mxu0 0.0
    %1450 = vmatpush1.msra.mxu0 0.0
    %1451 = vmatprep.subr.mxu0 0.0
    %1452 = vmatpush1.msra.mxu0 0.0
    %1453 = vmatprep.mubr.f32.mxu0 0.0
    %1454 = vmatmul.mubr.f32.gmra.mrb[0].mxu0 %v143
    %v1455 = vpop.f32.mrb[0].mxu0
    %v1456 = vadd.f32 0.0, %v1455
    %v1457 = vpop.f32.mrb[0].mxu0
    %1458 = vmatprep.mubr.f32.mxu0 0.0
    %1459 = vmatmul.mubr.f32.gmra.mrb[0].mxu0 %v146
    %v1460 = vpop.f32.mrb[0].mxu0
    %v1461 = vadd.f32 0.0, %v1460
    %v1462 = vpop.f32.mrb[0].mxu0
    %1463 = vdwg.mxu0
    %s1464 = scalar_lea.vmem [#allocation5], 112
    %v1465 = vld [vmem:[%s1464] sm:$0xff]
    %v1466 = vld [vmem:[%s1464 + $0x8] sm:$0xff]
    %v1468 = vsel %vm304, %v1465, 0
    %v1471 = vsel %vm304, %v1466, 0
    %1473 = vmatprep.subr.mxu0 0.0
    %1474 = vmatpush1.msra.mxu0 %v1456
    %1475 = vmatprep.subr.mxu0 0.0
    %1476 = vmatpush1.msra.mxu0 %v1461
    %1477 = vmatprep.subr.mxu0 0.0
    %1478 = vmatpush1.msra.mxu0 0.0
    %1479 = vmatprep.subr.mxu0 0.0
    %1480 = vmatpush1.msra.mxu0 0.0
    %1481 = vmatprep.subr.mxu0 0.0
    %1482 = vmatpush1.msra.mxu0 0.0
    %1483 = vmatprep.subr.mxu0 0.0
    %1484 = vmatpush1.msra.mxu0 0.0
    %1485 = vmatprep.subr.mxu0 0.0
    %1486 = vmatpush1.msra.mxu0 0.0
    %1487 = vmatprep.subr.mxu0 0.0
    %1488 = vmatpush1.msra.mxu0 0.0
    %1489 = vmatprep.subr.mxu0 0.0
    %1490 = vmatpush1.msra.mxu0 0.0
    %1491 = vmatprep.subr.mxu0 0.0
    %1492 = vmatpush1.msra.mxu0 0.0
    %1493 = vmatprep.subr.mxu0 0.0
    %1494 = vmatpush1.msra.mxu0 0.0
    %1495 = vmatprep.subr.mxu0 0.0
    %1496 = vmatpush1.msra.mxu0 0.0
    %1497 = vmatprep.subr.mxu0 0.0
    %1498 = vmatpush1.msra.mxu0 0.0
    %1499 = vmatprep.subr.mxu0 0.0
    %1500 = vmatpush1.msra.mxu0 0.0
    %1501 = vmatprep.subr.mxu0 0.0
    %1502 = vmatpush1.msra.mxu0 0.0
    %1503 = vmatprep.subr.mxu0 0.0
    %1504 = vmatpush1.msra.mxu0 0.0
    %1505 = vmatprep.subr.mxu0 0.0
    %1506 = vmatpush1.msra.mxu0 0.0
    %1507 = vmatprep.subr.mxu0 0.0
    %1508 = vmatpush1.msra.mxu0 0.0
    %1509 = vmatprep.subr.mxu0 0.0
    %1510 = vmatpush1.msra.mxu0 0.0
    %1511 = vmatprep.subr.mxu0 0.0
    %1512 = vmatpush1.msra.mxu0 0.0
    %1513 = vmatprep.subr.mxu0 0.0
    %1514 = vmatpush1.msra.mxu0 0.0
    %1515 = vmatprep.subr.mxu0 0.0
    %1516 = vmatpush1.msra.mxu0 0.0
    %1517 = vmatprep.subr.mxu0 0.0
    %1518 = vmatpush1.msra.mxu0 0.0
    %1519 = vmatprep.subr.mxu0 0.0
    %1520 = vmatpush1.msra.mxu0 0.0
    %1521 = vmatprep.subr.mxu0 0.0
    %1522 = vmatpush1.msra.mxu0 0.0
    %1523 = vmatprep.subr.mxu0 0.0
    %1524 = vmatpush1.msra.mxu0 0.0
    %1525 = vmatprep.subr.mxu0 0.0
    %1526 = vmatpush1.msra.mxu0 0.0
    %1527 = vmatprep.subr.mxu0 0.0
    %1528 = vmatpush1.msra.mxu0 0.0
    %1529 = vmatprep.subr.mxu0 0.0
    %1530 = vmatpush1.msra.mxu0 0.0
    %1531 = vmatprep.subr.mxu0 0.0
    %1532 = vmatpush1.msra.mxu0 0.0
    %1533 = vmatprep.subr.mxu0 0.0
    %1534 = vmatpush1.msra.mxu0 0.0
    %1535 = vmatprep.subr.mxu0 0.0
    %1536 = vmatpush1.msra.mxu0 0.0
    %1537 = vmatprep.mubr.f32.mxu0 0.0
    %1538 = vmatmul.mubr.f32.gmra.mrb[0].mxu0 %v1468
    %v1539 = vpop.f32.mrb[0].mxu0
    %v1540 = vadd.f32 0.0, %v1539
    %v1541 = vpop.f32.mrb[0].mxu0
    %1542 = vmatprep.mubr.f32.mxu0 0.0
    %1543 = vmatmul.mubr.f32.gmra.mrb[0].mxu0 %v1471
    %v1544 = vpop.f32.mrb[0].mxu0
    %v1545 = vadd.f32 0.0, %v1544
    %v1546 = vpop.f32.mrb[0].mxu0
    %1547 = vdwg.mxu0
    %v1548 = vadd.f32 %v1382, %v1540
    %v1549 = vadd.f32 %v1383, %v1545
    %v1550 = vld [vmem:[#allocation11] sm:$0xff]
    %v1551 = vld [vmem:[#allocation11 + $0x8] sm:$0xff]
    %v1552 = vld [vmem:[#allocation11 + $0x10] sm:$0xff]
    %v1553 = vld [vmem:[#allocation11 + $0x18] sm:$0xff]
    %v1555 = vsel %vm141, %v1548, 0
    %v1558 = vsel %vm141, %v1549, 0
    %1560 = vmatprep.subr.mxu0 0.0
    %1561 = vmatpush1.msra.mxu0 %v1550
    %1562 = vmatprep.subr.mxu0 0.0
    %1563 = vmatpush1.msra.mxu0 %v1551
    %1564 = vmatprep.subr.mxu0 0.0
    %1565 = vmatpush1.msra.mxu0 %v1552
    %1566 = vmatprep.subr.mxu0 0.0
    %1567 = vmatpush1.msra.mxu0 %v1553
    %1568 = vmatprep.subr.mxu0 0.0
    %1569 = vmatpush1.msra.mxu0 0.0
    %1570 = vmatprep.subr.mxu0 0.0
    %1571 = vmatpush1.msra.mxu0 0.0
    %1572 = vmatprep.subr.mxu0 0.0
    %1573 = vmatpush1.msra.mxu0 0.0
    %1574 = vmatprep.subr.mxu0 0.0
    %1575 = vmatpush1.msra.mxu0 0.0
    %1576 = vmatprep.subr.mxu0 0.0
    %1577 = vmatpush1.msra.mxu0 0.0
    %1578 = vmatprep.subr.mxu0 0.0
    %1579 = vmatpush1.msra.mxu0 0.0
    %1580 = vmatprep.subr.mxu0 0.0
    %1581 = vmatpush1.msra.mxu0 0.0
    %1582 = vmatprep.subr.mxu0 0.0
    %1583 = vmatpush1.msra.mxu0 0.0
    %1584 = vmatprep.subr.mxu0 0.0
    %1585 = vmatpush1.msra.mxu0 0.0
    %1586 = vmatprep.subr.mxu0 0.0
    %1587 = vmatpush1.msra.mxu0 0.0
    %1588 = vmatprep.subr.mxu0 0.0
    %1589 = vmatpush1.msra.mxu0 0.0
    %1590 = vmatprep.subr.mxu0 0.0
    %1591 = vmatpush1.msra.mxu0 0.0
    %1592 = vmatprep.subr.mxu0 0.0
    %1593 = vmatpush1.msra.mxu0 0.0
    %1594 = vmatprep.subr.mxu0 0.0
    %1595 = vmatpush1.msra.mxu0 0.0
    %1596 = vmatprep.subr.mxu0 0.0
    %1597 = vmatpush1.msra.mxu0 0.0
    %1598 = vmatprep.subr.mxu0 0.0
    %1599 = vmatpush1.msra.mxu0 0.0
    %1600 = vmatprep.subr.mxu0 0.0
    %1601 = vmatpush1.msra.mxu0 0.0
    %1602 = vmatprep.subr.mxu0 0.0
    %1603 = vmatpush1.msra.mxu0 0.0
    %1604 = vmatprep.subr.mxu0 0.0
    %1605 = vmatpush1.msra.mxu0 0.0
    %1606 = vmatprep.subr.mxu0 0.0
    %1607 = vmatpush1.msra.mxu0 0.0
    %1608 = vmatprep.subr.mxu0 0.0
    %1609 = vmatpush1.msra.mxu0 0.0
    %1610 = vmatprep.subr.mxu0 0.0
    %1611 = vmatpush1.msra.mxu0 0.0
    %1612 = vmatprep.subr.mxu0 0.0
    %1613 = vmatpush1.msra.mxu0 0.0
    %1614 = vmatprep.subr.mxu0 0.0
    %1615 = vmatpush1.msra.mxu0 0.0
    %1616 = vmatprep.subr.mxu0 0.0
    %1617 = vmatpush1.msra.mxu0 0.0
    %1618 = vmatprep.subr.mxu0 0.0
    %1619 = vmatpush1.msra.mxu0 0.0
    %1620 = vmatprep.subr.mxu0 0.0
    %1621 = vmatpush1.msra.mxu0 0.0
    %1622 = vmatprep.subr.mxu0 0.0
    %1623 = vmatpush1.msra.mxu0 0.0
    %1624 = vmatprep.mubr.f32.mxu0 0.0
    %1625 = vmatmul.mubr.f32.gmra.mrb[0].mxu0 %v1555
    %v1626 = vpop.f32.mrb[0].mxu0
    %v1627 = vadd.f32 0.0, %v1626
    %v1628 = vpop.f32.mrb[0].mxu0
    %1629 = vmatprep.mubr.f32.mxu0 0.0
    %1630 = vmatmul.mubr.f32.gmra.mrb[0].mxu0 %v1558
    %v1631 = vpop.f32.mrb[0].mxu0
    %v1632 = vadd.f32 0.0, %v1631
    %v1633 = vpop.f32.mrb[0].mxu0
    %1634 = vdwg.mxu0
    %v1635 = vld [vmem:[#allocation7] sm:$0xff]
    %v1636 = vld [vmem:[#allocation7 + $0x8] sm:$0xff]
    %v1637 = vld [vmem:[#allocation13] sm:$0xff]
    %v1638 = vld [vmem:[#allocation13 + $0x8] sm:$0xff]
    %v1639 = vld [vmem:[#allocation13 + $0x10] sm:$0xff]
    %v1640 = vld [vmem:[#allocation13 + $0x18] sm:$0xff]
    %1641 = vmatprep.subr.mxu0 0.0
    %1642 = vmatpush1.msra.mxu0 %v1637
    %1643 = vmatprep.subr.mxu0 0.0
    %1644 = vmatpush1.msra.mxu0 %v1638
    %1645 = vmatprep.subr.mxu0 0.0
    %1646 = vmatpush1.msra.mxu0 %v1639
    %1647 = vmatprep.subr.mxu0 0.0
    %1648 = vmatpush1.msra.mxu0 %v1640
    %1649 = vmatprep.subr.mxu0 0.0
    %1650 = vmatpush1.msra.mxu0 0.0
    %1651 = vmatprep.subr.mxu0 0.0
    %1652 = vmatpush1.msra.mxu0 0.0
    %1653 = vmatprep.subr.mxu0 0.0
    %1654 = vmatpush1.msra.mxu0 0.0
    %1655 = vmatprep.subr.mxu0 0.0
    %1656 = vmatpush1.msra.mxu0 0.0
    %1657 = vmatprep.subr.mxu0 0.0
    %1658 = vmatpush1.msra.mxu0 0.0
    %1659 = vmatprep.subr.mxu0 0.0
    %1660 = vmatpush1.msra.mxu0 0.0
    %1661 = vmatprep.subr.mxu0 0.0
    %1662 = vmatpush1.msra.mxu0 0.0
    %1663 = vmatprep.subr.mxu0 0.0
    %1664 = vmatpush1.msra.mxu0 0.0
    %1665 = vmatprep.subr.mxu0 0.0
    %1666 = vmatpush1.msra.mxu0 0.0
    %1667 = vmatprep.subr.mxu0 0.0
    %1668 = vmatpush1.msra.mxu0 0.0
    %1669 = vmatprep.subr.mxu0 0.0
    %1670 = vmatpush1.msra.mxu0 0.0
    %1671 = vmatprep.subr.mxu0 0.0
    %1672 = vmatpush1.msra.mxu0 0.0
    %1673 = vmatprep.subr.mxu0 0.0
    %1674 = vmatpush1.msra.mxu0 0.0
    %1675 = vmatprep.subr.mxu0 0.0
    %1676 = vmatpush1.msra.mxu0 0.0
    %1677 = vmatprep.subr.mxu0 0.0
    %1678 = vmatpush1.msra.mxu0 0.0
    %1679 = vmatprep.subr.mxu0 0.0
    %1680 = vmatpush1.msra.mxu0 0.0
    %1681 = vmatprep.subr.mxu0 0.0
    %1682 = vmatpush1.msra.mxu0 0.0
    %1683 = vmatprep.subr.mxu0 0.0
    %1684 = vmatpush1.msra.mxu0 0.0
    %1685 = vmatprep.subr.mxu0 0.0
    %1686 = vmatpush1.msra.mxu0 0.0
    %1687 = vmatprep.subr.mxu0 0.0
    %1688 = vmatpush1.msra.mxu0 0.0
    %1689 = vmatprep.subr.mxu0 0.0
    %1690 = vmatpush1.msra.mxu0 0.0
    %1691 = vmatprep.subr.mxu0 0.0
    %1692 = vmatpush1.msra.mxu0 0.0
    %1693 = vmatprep.subr.mxu0 0.0
    %1694 = vmatpush1.msra.mxu0 0.0
    %1695 = vmatprep.subr.mxu0 0.0
    %1696 = vmatpush1.msra.mxu0 0.0
    %1697 = vmatprep.subr.mxu0 0.0
    %1698 = vmatpush1.msra.mxu0 0.0
    %1699 = vmatprep.subr.mxu0 0.0
    %1700 = vmatpush1.msra.mxu0 0.0
    %1701 = vmatprep.subr.mxu0 0.0
    %1702 = vmatpush1.msra.mxu0 0.0
    %1703 = vmatprep.subr.mxu0 0.0
    %1704 = vmatpush1.msra.mxu0 0.0
    %1705 = vmatprep.mubr.f32.mxu0 0.0
    %1706 = vmatmul.mubr.f32.gmra.mrb[0].mxu0 %v1555
    %v1707 = vpop.f32.mrb[0].mxu0
    %v1708 = vadd.f32 0.0, %v1707
    %v1709 = vpop.f32.mrb[0].mxu0
    %1710 = vmatprep.mubr.f32.mxu0 0.0
    %1711 = vmatmul.mubr.f32.gmra.mrb[0].mxu0 %v1558
    %v1712 = vpop.f32.mrb[0].mxu0
    %v1713 = vadd.f32 0.0, %v1712
    %v1714 = vpop.f32.mrb[0].mxu0
    %1715 = vdwg.mxu0
    %v1717 = vsel %vm304, %v1635, 0
    %v1720 = vsel %vm304, %v1636, 0
    %1722 = vmatprep.subr.mxu0 0.0
    %1723 = vmatpush1.msra.mxu0 %v1627
    %1724 = vmatprep.subr.mxu0 0.0
    %1725 = vmatpush1.msra.mxu0 %v1632
    %1726 = vmatprep.subr.mxu0 0.0
    %1727 = vmatpush1.msra.mxu0 0.0
    %1728 = vmatprep.subr.mxu0 0.0
    %1729 = vmatpush1.msra.mxu0 0.0
    %1730 = vmatprep.subr.mxu0 0.0
    %1731 = vmatpush1.msra.mxu0 0.0
    %1732 = vmatprep.subr.mxu0 0.0
    %1733 = vmatpush1.msra.mxu0 0.0
    %1734 = vmatprep.subr.mxu0 0.0
    %1735 = vmatpush1.msra.mxu0 0.0
    %1736 = vmatprep.subr.mxu0 0.0
    %1737 = vmatpush1.msra.mxu0 0.0
    %1738 = vmatprep.subr.mxu0 0.0
    %1739 = vmatpush1.msra.mxu0 0.0
    %1740 = vmatprep.subr.mxu0 0.0
    %1741 = vmatpush1.msra.mxu0 0.0
    %1742 = vmatprep.subr.mxu0 0.0
    %1743 = vmatpush1.msra.mxu0 0.0
    %1744 = vmatprep.subr.mxu0 0.0
    %1745 = vmatpush1.msra.mxu0 0.0
    %1746 = vmatprep.subr.mxu0 0.0
    %1747 = vmatpush1.msra.mxu0 0.0
    %1748 = vmatprep.subr.mxu0 0.0
    %1749 = vmatpush1.msra.mxu0 0.0
    %1750 = vmatprep.subr.mxu0 0.0
    %1751 = vmatpush1.msra.mxu0 0.0
    %1752 = vmatprep.subr.mxu0 0.0
    %1753 = vmatpush1.msra.mxu0 0.0
    %1754 = vmatprep.subr.mxu0 0.0
    %1755 = vmatpush1.msra.mxu0 0.0
    %1756 = vmatprep.subr.mxu0 0.0
    %1757 = vmatpush1.msra.mxu0 0.0
    %1758 = vmatprep.subr.mxu0 0.0
    %1759 = vmatpush1.msra.mxu0 0.0
    %1760 = vmatprep.subr.mxu0 0.0
    %1761 = vmatpush1.msra.mxu0 0.0
    %1762 = vmatprep.subr.mxu0 0.0
    %1763 = vmatpush1.msra.mxu0 0.0
    %1764 = vmatprep.subr.mxu0 0.0
    %1765 = vmatpush1.msra.mxu0 0.0
    %1766 = vmatprep.subr.mxu0 0.0
    %1767 = vmatpush1.msra.mxu0 0.0
    %1768 = vmatprep.subr.mxu0 0.0
    %1769 = vmatpush1.msra.mxu0 0.0
    %1770 = vmatprep.subr.mxu0 0.0
    %1771 = vmatpush1.msra.mxu0 0.0
    %1772 = vmatprep.subr.mxu0 0.0
    %1773 = vmatpush1.msra.mxu0 0.0
    %1774 = vmatprep.subr.mxu0 0.0
    %1775 = vmatpush1.msra.mxu0 0.0
    %1776 = vmatprep.subr.mxu0 0.0
    %1777 = vmatpush1.msra.mxu0 0.0
    %1778 = vmatprep.subr.mxu0 0.0
    %1779 = vmatpush1.msra.mxu0 0.0
    %1780 = vmatprep.subr.mxu0 0.0
    %1781 = vmatpush1.msra.mxu0 0.0
    %1782 = vmatprep.subr.mxu0 0.0
    %1783 = vmatpush1.msra.mxu0 0.0
    %1784 = vmatprep.subr.mxu0 0.0
    %1785 = vmatpush1.msra.mxu0 0.0
    %1786 = vmatprep.mubr.f32.mxu0 0.0
    %1787 = vmatmul.mubr.f32.gmra.mrb[0].mxu0 %v1717
    %v1788 = vpop.f32.mrb[0].mxu0
    %v1789 = vadd.f32 %v1708, %v1788
    %v1790 = vpop.f32.mrb[0].mxu0
    %1791 = vmatprep.mubr.f32.mxu0 0.0
    %1792 = vmatmul.mubr.f32.gmra.mrb[0].mxu0 %v1720
    %v1793 = vpop.f32.mrb[0].mxu0
    %v1794 = vadd.f32 %v1713, %v1793
    %v1795 = vpop.f32.mrb[0].mxu0
    %1796 = vdwg.mxu0
    %v1797 = vld [vmem:[%s8] sm:$0x1]
    %v1799 = vlaneseq
    %v1800 = vshrl.u32 %v1799, 7
    %v1801 = vsub.s32 0, %v1800
    %v1802 = vrot.slane %v1797, %v1801
    %v1804 = vadd.f32 %v1789, %v1802
    %v1805 = vadd.f32 %v1794, %v1802
    %1806 = vst.msk [vmem:[#allocation14] sm:$0xff] %vm141, %v1804
    %1807 = vst.msk [vmem:[#allocation14 + $0x8] sm:$0xff] %vm141, %v1805
    // Predicated region
    $region66: #{tpu_custom_call.1} parent=1 // pred_check
      _
    $region67: #{tpu_custom_call.1} parent=1 // pred_check_branch
      %1809 = sbr.rel (0) target = $region69
    $region68: #{tpu_custom_call.1} parent=1 // pred_region
      %s1811 = ssub.s32 256, 256
      %1812 = vsyncadd [#allocation4], %s1811
      %s1813 = sshll.u32 [#allocation14], 4
      %s1814 = int_to_ptr.vmem [resolvable:$true] %s1813
      %1819 = dma.vmem_to_hbm [thread:$0]  %s1814, 256, %s9, [#allocation4], 128, 128, 8
    $region69: #{tpu_custom_call.1} parent=1 // pred_fallthru
      _
    // Predicated region
    $region70: #{tpu_custom_call.1} parent=1 // pred_check
      _
    $region71: #{tpu_custom_call.1} parent=1 // pred_check_branch
      %1821 = sbr.rel (0) target = $region73
    $region72: #{tpu_custom_call.1} parent=1 // pred_region
      %1822 = dma.done [#allocation4], 256
    $region73: #{tpu_custom_call.1} parent=1 // pred_fallthru
      _
    %1823 = vsyncpa [#allocation3], 1
    %1824 = vsyncpa [#allocation6], 1
    %1825 = vsyncpa [#allocation9], 1
    %1826 = vsyncpa [#allocation12], 1
    %1827 = vsyncpa [#allocation4], 1

</llo_original>
